<compile_context>
chip_gen: v5e
topology: v5e:2x2
jax: 0.10.0
libtpu: 0.0.40
codegen_flags: <defaults>
</compile_context>

<pallas_src>
import jax
import jax.numpy as jnp
from jax.experimental import pallas as pl
from jax.experimental.pallas import tpu as pltpu

HIDDEN_DIM = 400
HIDDEN_DIM2 = 256
HIDDEN_DIM3 = 128
LATENT_DIM = 64
NEG_SLOPE = 0.2

LANE = 128
SUBLANE = 8
# 256 rows is safe on all generations (v5e/v6e 128 MiB VMEM, v7x 64 MiB);
# larger batches simply add grid steps that shard across cores on v7x.
MAX_TILE_B = 256


def _round_up(x, m):
    return (x + m - 1) // m * m


def _leaky_relu(h):
    return jnp.where(h > 0, h, NEG_SLOPE * h)


# ----------------------------------------------------------------------------
# Kernel
# ----------------------------------------------------------------------------
def encoder_kernel(x_ref, w1, b1, w2, b2, w3, b3, w4, b4, wmv, bmv, out_ref):
    # Whole MLP per batch tile: 5 MXU matmuls (bf16 inputs, f32 accumulation)
    # + f32 VPU bias/LeakyReLU.  Weights are VMEM-resident across grid steps.
    def layer(h_f32, w_ref, b_ref):
        acc = jnp.dot(h_f32.astype(jnp.bfloat16), w_ref[...],
                      preferred_element_type=jnp.float32) + b_ref[...]
        return _leaky_relu(acc)

    h = layer(x_ref[...], w1, b1)
    h = layer(h, w2, b2)
    h = layer(h, w3, b3)
    h = layer(h, w4, b4)
    # Fused mean|log_var head: one [TILE_B, 128] output -> unmasked stores.
    out_ref[...] = (jnp.dot(h.astype(jnp.bfloat16), wmv[...],
                            preferred_element_type=jnp.float32) + bmv[...])


# ----------------------------------------------------------------------------
# Parameter packing (pad widths to lane multiples, fuse head, bf16 weights)
# ----------------------------------------------------------------------------
def _pad2(a, rows, cols):
    return jnp.pad(a, ((0, rows - a.shape[0]), (0, cols - a.shape[1])))


def pack_params(params, input_dim):
    """Zero-pad to 128-lane widths, fuse mean|var, cast weights to bf16."""
    w1, b1, w2, b2, w3, b3, w4, b4, wm, bm, wv, bv = params
    p_in = _round_up(input_dim, LANE)    # 168 -> 256
    h1 = _round_up(HIDDEN_DIM, LANE)     # 400 -> 512
    h2 = _round_up(HIDDEN_DIM2, LANE)    # 256
    h3 = _round_up(HIDDEN_DIM3, LANE)    # 128

    wmv = jnp.concatenate([wm, wv], axis=1)   # [128, 128]
    bmv = jnp.concatenate([bm, bv], axis=1)   # [1, 128]

    packed = [
        _pad2(w1, p_in, h1).astype(jnp.bfloat16), _pad2(b1, 1, h1),
        _pad2(w2, h1, h1).astype(jnp.bfloat16),   _pad2(b2, 1, h1),
        _pad2(w3, h1, h2).astype(jnp.bfloat16),   _pad2(b3, 1, h2),
        _pad2(w4, h2, h3).astype(jnp.bfloat16),   _pad2(b4, 1, h3),
        wmv.astype(jnp.bfloat16),                 bmv,
    ]
    return packed, p_in


# ----------------------------------------------------------------------------
# Wrapper
# ----------------------------------------------------------------------------
def encoder_forward(x, packed_params, p_in):
    """x: [B, input_dim] f32.  packed_params from pack_params()."""
    B, in_dim = x.shape
    tile_b = min(MAX_TILE_B, _round_up(B, SUBLANE))
    b_pad = _round_up(B, tile_b)
    x_pad = jnp.pad(x, ((0, b_pad - B), (0, p_in - in_dim)))

    out_dim = 2 * LATENT_DIM  # fused mean|log_var

    weight_specs = [
        pl.BlockSpec(p.shape, lambda i: (0, 0))  # constant index -> VMEM-resident
        for p in packed_params
    ]

    out = pl.pallas_call(
        encoder_kernel,
        out_shape=jax.ShapeDtypeStruct((b_pad, out_dim), jnp.float32),
        grid=(b_pad // tile_b,),
        in_specs=[pl.BlockSpec((tile_b, p_in), lambda i: (i, 0))] + weight_specs,
        out_specs=pl.BlockSpec((tile_b, out_dim), lambda i: (i, 0)),
        compiler_params=pltpu.CompilerParams(
            dimension_semantics=("parallel",),
            vmem_limit_bytes=16 << 20,
        ),
    )(x_pad, *packed_params)

    out = out[:B]
    return out[:, :LATENT_DIM], out[:, LATENT_DIM:]


# ----------------------------------------------------------------------------
# Init + reference (reference mimics kernel numerics: bf16 dots, f32 acc)
# ----------------------------------------------------------------------------
def init_linear(key, fan_in, fan_out):
    """nn.Linear-style init: U(-1/sqrt(fan_in), 1/sqrt(fan_in)).
    Weight returned as [fan_in, fan_out] (transposed for x @ W)."""
    kw, kb = jax.random.split(key)
    bound = 1.0 / jnp.sqrt(jnp.float32(fan_in))
    w = jax.random.uniform(kw, (fan_in, fan_out), jnp.float32, -bound, bound)
    b = jax.random.uniform(kb, (1, fan_out), jnp.float32, -bound, bound)
    return w, b


def make_params(key, input_dim):
    dims = [
        (input_dim, HIDDEN_DIM),     # FC_input
        (HIDDEN_DIM, HIDDEN_DIM),    # FC_input2
        (HIDDEN_DIM, HIDDEN_DIM2),   # FC_input3
        (HIDDEN_DIM2, HIDDEN_DIM3),  # FC_input4
        (HIDDEN_DIM3, LATENT_DIM),   # FC_mean
        (HIDDEN_DIM3, LATENT_DIM),   # FC_var
    ]
    keys = jax.random.split(key, len(dims))
    params = []
    for k, (fi, fo) in zip(keys, dims):
        w, b = init_linear(k, fi, fo)
        params.extend([w, b])
    return params


def reference_forward(x, params):
    w1, b1, w2, b2, w3, b3, w4, b4, wm, bm, wv, bv = params

    def lin(h, w, b):
        return jnp.dot(h.astype(jnp.bfloat16), w.astype(jnp.bfloat16),
                       preferred_element_type=jnp.float32) + b

    h = _leaky_relu(lin(x, w1, b1))
    h = _leaky_relu(lin(h, w2, b2))
    h = _leaky_relu(lin(h, w3, b3))
    h = _leaky_relu(lin(h, w4, b4))
    return lin(h, wm, bm), lin(h, wv, bv)


if __name__ == "__main__":
    key = jax.random.PRNGKey(0)
    k_x, k_p = jax.random.split(key)

    batch = 8
    input_dim = 168  # e.g. seq_len=8 x 21-way one-hot amino-acid encoding

    x = jax.random.normal(k_x, (batch, input_dim), jnp.float32)
    params = make_params(k_p, input_dim)
    packed, p_in = pack_params(params, input_dim)

    mean, log_var = encoder_forward(x, packed, p_in)
    jax.block_until_ready((mean, log_var))

    ref_mean, ref_log_var = reference_forward(x, params)

    assert mean.shape == (batch, LATENT_DIM)
    assert log_var.shape == (batch, LATENT_DIM)
    assert jnp.allclose(mean, ref_mean, atol=2e-3, rtol=2e-3)
    assert jnp.allclose(log_var, ref_log_var, atol=2e-3, rtol=2e-3)

    print("KERNEL_OK")
</pallas_src>

<mosaic_0001>
module attributes {stable_mosaic.version = 11 : i64} {
  func.func @encoder_kernel(%arg0: i32, %arg1: memref<8x256xf32, #tpu.memory_space<vmem>>, %arg2: memref<256x512xbf16, #tpu.memory_space<vmem>>, %arg3: memref<1x512xf32, #tpu.memory_space<vmem>>, %arg4: memref<512x512xbf16, #tpu.memory_space<vmem>>, %arg5: memref<1x512xf32, #tpu.memory_space<vmem>>, %arg6: memref<512x256xbf16, #tpu.memory_space<vmem>>, %arg7: memref<1x256xf32, #tpu.memory_space<vmem>>, %arg8: memref<256x128xbf16, #tpu.memory_space<vmem>>, %arg9: memref<1x128xf32, #tpu.memory_space<vmem>>, %arg10: memref<128x128xbf16, #tpu.memory_space<vmem>>, %arg11: memref<1x128xf32, #tpu.memory_space<vmem>>, %arg12: memref<8x128xf32, #tpu.memory_space<vmem>>) attributes {dimension_semantics = [#tpu.dimension_semantics<parallel>], iteration_bounds = array<i64: 1>, scalar_prefetch = 0 : i64, scratch_operands = 0 : i64, tpu.core_type = #tpu.core_type<tc>, window_params = [{transform_indices = @transform_0, window_bounds = array<i64: 8, 256>}, {pipeline_mode = #tpu.pipeline_mode<synchronous>, transform_indices = @transform_1, window_bounds = array<i64: 256, 512>}, {pipeline_mode = #tpu.pipeline_mode<synchronous>, transform_indices = @transform_2, window_bounds = array<i64: 1, 512>}, {pipeline_mode = #tpu.pipeline_mode<synchronous>, transform_indices = @transform_3, window_bounds = array<i64: 512, 512>}, {pipeline_mode = #tpu.pipeline_mode<synchronous>, transform_indices = @transform_4, window_bounds = array<i64: 1, 512>}, {pipeline_mode = #tpu.pipeline_mode<synchronous>, transform_indices = @transform_5, window_bounds = array<i64: 512, 256>}, {pipeline_mode = #tpu.pipeline_mode<synchronous>, transform_indices = @transform_6, window_bounds = array<i64: 1, 256>}, {pipeline_mode = #tpu.pipeline_mode<synchronous>, transform_indices = @transform_7, window_bounds = array<i64: 256, 128>}, {pipeline_mode = #tpu.pipeline_mode<synchronous>, transform_indices = @transform_8, window_bounds = array<i64: 1, 128>}, {pipeline_mode = #tpu.pipeline_mode<synchronous>, transform_indices = @transform_9, window_bounds = array<i64: 128, 128>}, {pipeline_mode = #tpu.pipeline_mode<synchronous>, transform_indices = @transform_10, window_bounds = array<i64: 1, 128>}, {transform_indices = @transform_11, window_bounds = array<i64: 8, 128>}]} {
    %c0 = arith.constant 0 : index
    %c0_0 = arith.constant 0 : index
    %0 = vector.load %arg1[%c0, %c0_0] : memref<8x256xf32, #tpu.memory_space<vmem>>, vector<8x256xf32>
    %1 = arith.truncf %0 : vector<8x256xf32> to vector<8x256xbf16>
    %c0_1 = arith.constant 0 : index
    %c0_2 = arith.constant 0 : index
    %2 = vector.load %arg2[%c0_1, %c0_2] : memref<256x512xbf16, #tpu.memory_space<vmem>>, vector<256x512xbf16>
    %cst = arith.constant dense<0.000000e+00> : vector<8x512xf32>
    %3 = tpu.matmul %1, %2, %cst {dimension_numbers = #tpu.dot_dimension_numbers<[1], [0], [0], [1], [0, 0, 1, 1], [], []>} : vector<8x256xbf16>, vector<256x512xbf16>, vector<8x512xf32> -> vector<8x512xf32>
    %c0_3 = arith.constant 0 : index
    %c0_4 = arith.constant 0 : index
    %4 = vector.load %arg3[%c0_3, %c0_4] : memref<1x512xf32, #tpu.memory_space<vmem>>, vector<1x512xf32>
    %5 = vector.broadcast %4 : vector<1x512xf32> to vector<8x512xf32>
    %6 = arith.addf %3, %5 : vector<8x512xf32>
    %cst_5 = arith.constant 0.000000e+00 : f32
    %7 = vector.broadcast %cst_5 : f32 to vector<8x512xf32>
    %8 = arith.cmpf ogt, %6, %7 : vector<8x512xf32>
    %cst_6 = arith.constant 2.000000e-01 : f32
    %9 = vector.broadcast %cst_6 : f32 to vector<8x512xf32>
    %10 = arith.mulf %9, %6 : vector<8x512xf32>
    %11 = arith.select %8, %6, %10 : vector<8x512xi1>, vector<8x512xf32>
    %12 = arith.truncf %11 : vector<8x512xf32> to vector<8x512xbf16>
    %c0_7 = arith.constant 0 : index
    %c0_8 = arith.constant 0 : index
    %13 = vector.load %arg4[%c0_7, %c0_8] : memref<512x512xbf16, #tpu.memory_space<vmem>>, vector<512x512xbf16>
    %cst_9 = arith.constant dense<0.000000e+00> : vector<8x512xf32>
    %14 = tpu.matmul %12, %13, %cst_9 {dimension_numbers = #tpu.dot_dimension_numbers<[1], [0], [0], [1], [0, 0, 1, 1], [], []>} : vector<8x512xbf16>, vector<512x512xbf16>, vector<8x512xf32> -> vector<8x512xf32>
    %c0_10 = arith.constant 0 : index
    %c0_11 = arith.constant 0 : index
    %15 = vector.load %arg5[%c0_10, %c0_11] : memref<1x512xf32, #tpu.memory_space<vmem>>, vector<1x512xf32>
    %16 = vector.broadcast %15 : vector<1x512xf32> to vector<8x512xf32>
    %17 = arith.addf %14, %16 : vector<8x512xf32>
    %cst_12 = arith.constant 0.000000e+00 : f32
    %18 = vector.broadcast %cst_12 : f32 to vector<8x512xf32>
    %19 = arith.cmpf ogt, %17, %18 : vector<8x512xf32>
    %cst_13 = arith.constant 2.000000e-01 : f32
    %20 = vector.broadcast %cst_13 : f32 to vector<8x512xf32>
    %21 = arith.mulf %20, %17 : vector<8x512xf32>
    %22 = arith.select %19, %17, %21 : vector<8x512xi1>, vector<8x512xf32>
    %23 = arith.truncf %22 : vector<8x512xf32> to vector<8x512xbf16>
    %c0_14 = arith.constant 0 : index
    %c0_15 = arith.constant 0 : index
    %24 = vector.load %arg6[%c0_14, %c0_15] : memref<512x256xbf16, #tpu.memory_space<vmem>>, vector<512x256xbf16>
    %cst_16 = arith.constant dense<0.000000e+00> : vector<8x256xf32>
    %25 = tpu.matmul %23, %24, %cst_16 {dimension_numbers = #tpu.dot_dimension_numbers<[1], [0], [0], [1], [0, 0, 1, 1], [], []>} : vector<8x512xbf16>, vector<512x256xbf16>, vector<8x256xf32> -> vector<8x256xf32>
    %c0_17 = arith.constant 0 : index
    %c0_18 = arith.constant 0 : index
    %26 = vector.load %arg7[%c0_17, %c0_18] : memref<1x256xf32, #tpu.memory_space<vmem>>, vector<1x256xf32>
    %27 = vector.broadcast %26 : vector<1x256xf32> to vector<8x256xf32>
    %28 = arith.addf %25, %27 : vector<8x256xf32>
    %cst_19 = arith.constant 0.000000e+00 : f32
    %29 = vector.broadcast %cst_19 : f32 to vector<8x256xf32>
    %30 = arith.cmpf ogt, %28, %29 : vector<8x256xf32>
    %cst_20 = arith.constant 2.000000e-01 : f32
    %31 = vector.broadcast %cst_20 : f32 to vector<8x256xf32>
    %32 = arith.mulf %31, %28 : vector<8x256xf32>
    %33 = arith.select %30, %28, %32 : vector<8x256xi1>, vector<8x256xf32>
    %34 = arith.truncf %33 : vector<8x256xf32> to vector<8x256xbf16>
    %c0_21 = arith.constant 0 : index
    %c0_22 = arith.constant 0 : index
    %35 = vector.load %arg8[%c0_21, %c0_22] : memref<256x128xbf16, #tpu.memory_space<vmem>>, vector<256x128xbf16>
    %cst_23 = arith.constant dense<0.000000e+00> : vector<8x128xf32>
    %36 = tpu.matmul %34, %35, %cst_23 {dimension_numbers = #tpu.dot_dimension_numbers<[1], [0], [0], [1], [0, 0, 1, 1], [], []>} : vector<8x256xbf16>, vector<256x128xbf16>, vector<8x128xf32> -> vector<8x128xf32>
    %c0_24 = arith.constant 0 : index
    %c0_25 = arith.constant 0 : index
    %37 = vector.load %arg9[%c0_24, %c0_25] : memref<1x128xf32, #tpu.memory_space<vmem>>, vector<1x128xf32>
    %38 = vector.broadcast %37 : vector<1x128xf32> to vector<8x128xf32>
    %39 = arith.addf %36, %38 : vector<8x128xf32>
    %cst_26 = arith.constant 0.000000e+00 : f32
    %40 = vector.broadcast %cst_26 : f32 to vector<8x128xf32>
    %41 = arith.cmpf ogt, %39, %40 : vector<8x128xf32>
    %cst_27 = arith.constant 2.000000e-01 : f32
    %42 = vector.broadcast %cst_27 : f32 to vector<8x128xf32>
    %43 = arith.mulf %42, %39 : vector<8x128xf32>
    %44 = arith.select %41, %39, %43 : vector<8x128xi1>, vector<8x128xf32>
    %45 = arith.truncf %44 : vector<8x128xf32> to vector<8x128xbf16>
    %c0_28 = arith.constant 0 : index
    %c0_29 = arith.constant 0 : index
    %46 = vector.load %arg10[%c0_28, %c0_29] : memref<128x128xbf16, #tpu.memory_space<vmem>>, vector<128x128xbf16>
    %cst_30 = arith.constant dense<0.000000e+00> : vector<8x128xf32>
    %47 = tpu.matmul %45, %46, %cst_30 {dimension_numbers = #tpu.dot_dimension_numbers<[1], [0], [0], [1], [0, 0, 1, 1], [], []>} : vector<8x128xbf16>, vector<128x128xbf16>, vector<8x128xf32> -> vector<8x128xf32>
    %c0_31 = arith.constant 0 : index
    %c0_32 = arith.constant 0 : index
    %48 = vector.load %arg11[%c0_31, %c0_32] : memref<1x128xf32, #tpu.memory_space<vmem>>, vector<1x128xf32>
    %49 = vector.broadcast %48 : vector<1x128xf32> to vector<8x128xf32>
    %50 = arith.addf %47, %49 : vector<8x128xf32>
    %c0_33 = arith.constant 0 : index
    %c0_34 = arith.constant 0 : index
    %51 = vector.load %arg12[%c0_33, %c0_34] : memref<8x128xf32, #tpu.memory_space<vmem>>, vector<8x128xf32>
    tpu.vector_store %arg12[%c0_33, %c0_34], %50 {strides = array<i32>} : memref<8x128xf32, #tpu.memory_space<vmem>>, vector<8x128xf32>,
    return
  }
  func.func @transform_0(%arg0: i32) -> (i32, i32) {
    %c0_i32 = arith.constant 0 : i32
    %c0_i32_0 = arith.constant 0 : i32
    return %arg0, %c0_i32 : i32, i32
  }
  func.func @transform_1(%arg0: i32) -> (i32, i32) {
    %c0_i32 = arith.constant 0 : i32
    %c0_i32_0 = arith.constant 0 : i32
    %c0_i32_1 = arith.constant 0 : i32
    return %c0_i32, %c0_i32_0 : i32, i32
  }
  func.func @transform_2(%arg0: i32) -> (i32, i32) {
    %c0_i32 = arith.constant 0 : i32
    %c0_i32_0 = arith.constant 0 : i32
    %c0_i32_1 = arith.constant 0 : i32
    return %c0_i32, %c0_i32_0 : i32, i32
  }
  func.func @transform_3(%arg0: i32) -> (i32, i32) {
    %c0_i32 = arith.constant 0 : i32
    %c0_i32_0 = arith.constant 0 : i32
    %c0_i32_1 = arith.constant 0 : i32
    return %c0_i32, %c0_i32_0 : i32, i32
  }
  func.func @transform_4(%arg0: i32) -> (i32, i32) {
    %c0_i32 = arith.constant 0 : i32
    %c0_i32_0 = arith.constant 0 : i32
    %c0_i32_1 = arith.constant 0 : i32
    return %c0_i32, %c0_i32_0 : i32, i32
  }
  func.func @transform_5(%arg0: i32) -> (i32, i32) {
    %c0_i32 = arith.constant 0 : i32
    %c0_i32_0 = arith.constant 0 : i32
    %c0_i32_1 = arith.constant 0 : i32
    return %c0_i32, %c0_i32_0 : i32, i32
  }
  func.func @transform_6(%arg0: i32) -> (i32, i32) {
    %c0_i32 = arith.constant 0 : i32
    %c0_i32_0 = arith.constant 0 : i32
    %c0_i32_1 = arith.constant 0 : i32
    return %c0_i32, %c0_i32_0 : i32, i32
  }
  func.func @transform_7(%arg0: i32) -> (i32, i32) {
    %c0_i32 = arith.constant 0 : i32
    %c0_i32_0 = arith.constant 0 : i32
    %c0_i32_1 = arith.constant 0 : i32
    return %c0_i32, %c0_i32_0 : i32, i32
  }
  func.func @transform_8(%arg0: i32) -> (i32, i32) {
    %c0_i32 = arith.constant 0 : i32
    %c0_i32_0 = arith.constant 0 : i32
    %c0_i32_1 = arith.constant 0 : i32
    return %c0_i32, %c0_i32_0 : i32, i32
  }
  func.func @transform_9(%arg0: i32) -> (i32, i32) {
    %c0_i32 = arith.constant 0 : i32
    %c0_i32_0 = arith.constant 0 : i32
    %c0_i32_1 = arith.constant 0 : i32
    return %c0_i32, %c0_i32_0 : i32, i32
  }
  func.func @transform_10(%arg0: i32) -> (i32, i32) {
    %c0_i32 = arith.constant 0 : i32
    %c0_i32_0 = arith.constant 0 : i32
    %c0_i32_1 = arith.constant 0 : i32
    return %c0_i32, %c0_i32_0 : i32, i32
  }
  func.func @transform_11(%arg0: i32) -> (i32, i32) {
    %c0_i32 = arith.constant 0 : i32
    %c0_i32_0 = arith.constant 0 : i32
    return %arg0, %c0_i32 : i32, i32
  }
}

</mosaic_0001>

<llo_original>
// kernel: tpu_custom_call.1
$region0: #{tpu_custom_call.1}
  #allocation0 [shape = 'u32[]', space=smem, size = 0x4, offset = 0x4, fixed_abs, tag = 'smem constant byte address 0x4 - core index']
  #allocation1 [shape = 'u32[72,128]{1,0:T(1,128)}', space=vmem, size = 0x9000, scoped, tag = 'internal scratch']
  %s0 = inlined_call_operand.hbm [shape: f32[8,256], index: 0, kind: input, shape index: {}]
  %s1 = inlined_call_operand.hbm [shape: bf16[256,512], index: 1, kind: input, shape index: {}]
  %s2 = inlined_call_operand.hbm [shape: f32[1,512], index: 2, kind: input, shape index: {}]
  %s3 = inlined_call_operand.hbm [shape: bf16[512,512], index: 3, kind: input, shape index: {}]
  %s4 = inlined_call_operand.hbm [shape: f32[1,512], index: 4, kind: input, shape index: {}]
  %s5 = inlined_call_operand.hbm [shape: bf16[512,256], index: 5, kind: input, shape index: {}]
  %s6 = inlined_call_operand.vmem [shape: f32[1,256], index: 6, kind: input, shape index: {}]
  %s7 = inlined_call_operand.hbm [shape: bf16[256,128], index: 7, kind: input, shape index: {}]
  %s8 = inlined_call_operand.vmem [shape: f32[1,128], index: 8, kind: input, shape index: {}]
  %s9 = inlined_call_operand.hbm [shape: bf16[128,128], index: 9, kind: input, shape index: {}]
  %s10 = inlined_call_operand.vmem [shape: f32[1,128], index: 10, kind: input, shape index: {}]
  %s11 = inlined_call_operand.hbm [shape: f32[8,128], index: 11, kind: output, shape index: {}]
  %s12 = sld [smem:[#allocation0]]
  $region86: #{tpu_custom_call.1} parent=0
    _
  %s14 = ssub.s32 1, %s12
  %s15 = scalar_select 0, %s14, %s12
  $region1: #{tpu_custom_call.1} parent=0
    #allocation2 [shape = 'u8[8192]{0}', space=vmem, size = 0x2000, scoped, tag = 'input window, operand 0, single buffered']
    #allocation3 [shape = 's32[1]{0}', space=sflag, size = 0x4, scoped, tag = 'scoped memory for tpu_custom_call.1']
    #allocation4 [shape = 's32[1]{0}', space=sflag, size = 0x4, scoped, tag = 'scoped memory for tpu_custom_call.1']
    #allocation5 [shape = 'u8[262144]{0}', space=vmem, size = 0x40000, scoped, tag = 'input window, operand 1, single buffered']
    #allocation6 [shape = 's32[1]{0}', space=sflag, size = 0x4, scoped, tag = 'scoped memory for tpu_custom_call.1']
    #allocation7 [shape = 'u8[2048]{0}', space=vmem, size = 0x800, scoped, tag = 'input window, operand 2, single buffered']
    #allocation8 [shape = 'u8[524288]{0}', space=vmem, size = 0x80000, scoped, tag = 'input window, operand 3, single buffered']
    #allocation9 [shape = 's32[1]{0}', space=sflag, size = 0x4, scoped, tag = 'scoped memory for tpu_custom_call.1']
    #allocation10 [shape = 'u8[2048]{0}', space=vmem, size = 0x800, scoped, tag = 'input window, operand 4, single buffered']
    #allocation11 [shape = 'u8[262144]{0}', space=vmem, size = 0x40000, scoped, tag = 'input window, operand 5, single buffered']
    #allocation12 [shape = 's32[1]{0}', space=sflag, size = 0x4, scoped, tag = 'scoped memory for tpu_custom_call.1']
    #allocation13 [shape = 'u8[65536]{0}', space=vmem, size = 0x10000, scoped, tag = 'input window, operand 7, single buffered']
    #allocation14 [shape = 'u8[32768]{0}', space=vmem, size = 0x8000, scoped, tag = 'input window, operand 9, single buffered']
    #allocation15 [shape = 's32[1]{0}', space=sflag, size = 0x4, scoped, tag = 'scoped memory for tpu_custom_call.1']
    #allocation16 [shape = 'u8[4096]{0}', space=vmem, size = 0x1000, scoped, tag = 'output window, operand 0, single buffered']
    %16 = vsyncpa [#allocation3], 0
    %17 = vsyncpa [#allocation6], 0
    %18 = vsyncpa [#allocation9], 0
    %19 = vsyncpa [#allocation12], 0
    %20 = vsyncpa [#allocation15], 0
    %21 = vsyncpa [#allocation4], 0
    // Predicated region
    $region2: #{tpu_custom_call.1} parent=1 // pred_check
      _
    $region3: #{tpu_custom_call.1} parent=1 // pred_check_branch
      %23 = sbr.rel (0) target = $region5
    $region4: #{tpu_custom_call.1} parent=1 // pred_region
      %25 = vsyncadd [#allocation3], 0
      %s27 = sshll.u32 %s0, 4
      %s28 = int_to_ptr.hbm [resolvable:$true] %s27
      %s29 = sshll.u32 [#allocation2], 4
      %s30 = int_to_ptr.vmem [resolvable:$true] %s29
      %32 = dma.hbm_to_vmem [thread:$0]  %s28, 256, %s30, [#allocation3]
    $region5: #{tpu_custom_call.1} parent=1 // pred_fallthru
      _
    // Predicated region
    $region6: #{tpu_custom_call.1} parent=1 // pred_check
      _
    $region7: #{tpu_custom_call.1} parent=1 // pred_check_branch
      %34 = sbr.rel (0) target = $region9
    $region8: #{tpu_custom_call.1} parent=1 // pred_region
      %36 = vsyncadd [#allocation6], 0
      %s37 = sshll.u32 %s1, 4
      %s38 = int_to_ptr.hbm [resolvable:$true] %s37
      %s39 = sshll.u32 [#allocation5], 4
      %s40 = int_to_ptr.vmem [resolvable:$true] %s39
      %45 = dma.hbm_to_vmem [thread:$0]  %s38, 8192, %s40, [#allocation6], 256, 256, 16
    $region9: #{tpu_custom_call.1} parent=1 // pred_fallthru
      _
    // Predicated region
    $region10: #{tpu_custom_call.1} parent=1 // pred_check
      _
    $region11: #{tpu_custom_call.1} parent=1 // pred_check_branch
      %47 = sbr.rel (0) target = $region13
    $region12: #{tpu_custom_call.1} parent=1 // pred_region
      %49 = vsyncadd [#allocation6], 0
      %s51 = sshll.u32 %s2, 4
      %s52 = int_to_ptr.hbm [resolvable:$true] %s51
      %s53 = sshll.u32 [#allocation7], 4
      %s54 = int_to_ptr.vmem [resolvable:$true] %s53
      %56 = dma.hbm_to_vmem [thread:$0]  %s52, 64, %s54, [#allocation6]
    $region13: #{tpu_custom_call.1} parent=1 // pred_fallthru
      _
    // Predicated region
    $region14: #{tpu_custom_call.1} parent=1 // pred_check
      _
    $region15: #{tpu_custom_call.1} parent=1 // pred_check_branch
      %58 = sbr.rel (0) target = $region17
    $region16: #{tpu_custom_call.1} parent=1 // pred_region
      %60 = vsyncadd [#allocation9], 0
      %s61 = sshll.u32 %s3, 4
      %s62 = int_to_ptr.hbm [resolvable:$true] %s61
      %s63 = sshll.u32 [#allocation8], 4
      %s64 = int_to_ptr.vmem [resolvable:$true] %s63
      %69 = dma.hbm_to_vmem [thread:$0]  %s62, 16384, %s64, [#allocation9], 256, 256, 16
    $region17: #{tpu_custom_call.1} parent=1 // pred_fallthru
      _
    // Predicated region
    $region18: #{tpu_custom_call.1} parent=1 // pred_check
      _
    $region19: #{tpu_custom_call.1} parent=1 // pred_check_branch
      %71 = sbr.rel (0) target = $region21
    $region20: #{tpu_custom_call.1} parent=1 // pred_region
      %73 = vsyncadd [#allocation9], 0
      %s75 = sshll.u32 %s4, 4
      %s76 = int_to_ptr.hbm [resolvable:$true] %s75
      %s77 = sshll.u32 [#allocation10], 4
      %s78 = int_to_ptr.vmem [resolvable:$true] %s77
      %80 = dma.hbm_to_vmem [thread:$0]  %s76, 64, %s78, [#allocation9]
    $region21: #{tpu_custom_call.1} parent=1 // pred_fallthru
      _
    // Predicated region
    $region22: #{tpu_custom_call.1} parent=1 // pred_check
      _
    $region23: #{tpu_custom_call.1} parent=1 // pred_check_branch
      %82 = sbr.rel (0) target = $region25
    $region24: #{tpu_custom_call.1} parent=1 // pred_region
      %84 = vsyncadd [#allocation12], 0
      %s85 = sshll.u32 %s5, 4
      %s86 = int_to_ptr.hbm [resolvable:$true] %s85
      %s87 = sshll.u32 [#allocation11], 4
      %s88 = int_to_ptr.vmem [resolvable:$true] %s87
      %93 = dma.hbm_to_vmem [thread:$0]  %s86, 8192, %s88, [#allocation12], 128, 128, 8
    $region25: #{tpu_custom_call.1} parent=1 // pred_fallthru
      _
    // Predicated region
    $region26: #{tpu_custom_call.1} parent=1 // pred_check
      _
    $region27: #{tpu_custom_call.1} parent=1 // pred_check_branch
      %95 = sbr.rel (0) target = $region29
    $region28: #{tpu_custom_call.1} parent=1 // pred_region
      _
    $region29: #{tpu_custom_call.1} parent=1 // pred_fallthru
      _
    // Predicated region
    $region30: #{tpu_custom_call.1} parent=1 // pred_check
      _
    $region31: #{tpu_custom_call.1} parent=1 // pred_check_branch
      %97 = sbr.rel (0) target = $region33
    $region32: #{tpu_custom_call.1} parent=1 // pred_region
      %99 = vsyncadd [#allocation12], 0
      %s100 = sshll.u32 %s7, 4
      %s101 = int_to_ptr.hbm [resolvable:$true] %s100
      %s102 = sshll.u32 [#allocation13], 4
      %s103 = int_to_ptr.vmem [resolvable:$true] %s102
      %108 = dma.hbm_to_vmem [thread:$0]  %s101, 2048, %s103, [#allocation12], 64, 64, 4
    $region33: #{tpu_custom_call.1} parent=1 // pred_fallthru
      _
    // Predicated region
    $region34: #{tpu_custom_call.1} parent=1 // pred_check
      _
    $region35: #{tpu_custom_call.1} parent=1 // pred_check_branch
      %110 = sbr.rel (0) target = $region37
    $region36: #{tpu_custom_call.1} parent=1 // pred_region
      _
    $region37: #{tpu_custom_call.1} parent=1 // pred_fallthru
      _
    // Predicated region
    $region38: #{tpu_custom_call.1} parent=1 // pred_check
      _
    $region39: #{tpu_custom_call.1} parent=1 // pred_check_branch
      %112 = sbr.rel (0) target = $region41
    $region40: #{tpu_custom_call.1} parent=1 // pred_region
      %114 = vsyncadd [#allocation15], 0
      %s115 = sshll.u32 %s9, 4
      %s116 = int_to_ptr.hbm [resolvable:$true] %s115
      %s117 = sshll.u32 [#allocation14], 4
      %s118 = int_to_ptr.vmem [resolvable:$true] %s117
      %123 = dma.hbm_to_vmem [thread:$0]  %s116, 1024, %s118, [#allocation15], 64, 64, 4
    $region41: #{tpu_custom_call.1} parent=1 // pred_fallthru
      _
    // Predicated region
    $region42: #{tpu_custom_call.1} parent=1 // pred_check
      _
    $region43: #{tpu_custom_call.1} parent=1 // pred_check_branch
      %125 = sbr.rel (0) target = $region45
    $region44: #{tpu_custom_call.1} parent=1 // pred_region
      _
    $region45: #{tpu_custom_call.1} parent=1 // pred_fallthru
      _
    // Predicated region
    $region46: #{tpu_custom_call.1} parent=1 // pred_check
      _
    $region47: #{tpu_custom_call.1} parent=1 // pred_check_branch
      %127 = sbr.rel (0) target = $region49
    $region48: #{tpu_custom_call.1} parent=1 // pred_region
      %129 = dma.done [#allocation3], 256
    $region49: #{tpu_custom_call.1} parent=1 // pred_fallthru
      _
    // Predicated region
    $region50: #{tpu_custom_call.1} parent=1 // pred_check
      _
    $region51: #{tpu_custom_call.1} parent=1 // pred_check_branch
      %131 = sbr.rel (0) target = $region53
    $region52: #{tpu_custom_call.1} parent=1 // pred_region
      %133 = dma.done [#allocation6], 8192
    $region53: #{tpu_custom_call.1} parent=1 // pred_fallthru
      _
    // Predicated region
    $region54: #{tpu_custom_call.1} parent=1 // pred_check
      _
    $region55: #{tpu_custom_call.1} parent=1 // pred_check_branch
      %135 = sbr.rel (0) target = $region57
    $region56: #{tpu_custom_call.1} parent=1 // pred_region
      %137 = dma.done [#allocation6], 64
    $region57: #{tpu_custom_call.1} parent=1 // pred_fallthru
      _
    // Predicated region
    $region58: #{tpu_custom_call.1} parent=1 // pred_check
      _
    $region59: #{tpu_custom_call.1} parent=1 // pred_check_branch
      %139 = sbr.rel (0) target = $region61
    $region60: #{tpu_custom_call.1} parent=1 // pred_region
      %141 = dma.done [#allocation9], 16384
    $region61: #{tpu_custom_call.1} parent=1 // pred_fallthru
      _
    // Predicated region
    $region62: #{tpu_custom_call.1} parent=1 // pred_check
      _
    $region63: #{tpu_custom_call.1} parent=1 // pred_check_branch
      %143 = sbr.rel (0) target = $region65
    $region64: #{tpu_custom_call.1} parent=1 // pred_region
      %145 = dma.done [#allocation9], 64
    $region65: #{tpu_custom_call.1} parent=1 // pred_fallthru
      _
    // Predicated region
    $region66: #{tpu_custom_call.1} parent=1 // pred_check
      _
    $region67: #{tpu_custom_call.1} parent=1 // pred_check_branch
      %147 = sbr.rel (0) target = $region69
    $region68: #{tpu_custom_call.1} parent=1 // pred_region
      %149 = dma.done [#allocation12], 8192
    $region69: #{tpu_custom_call.1} parent=1 // pred_fallthru
      _
    // Predicated region
    $region70: #{tpu_custom_call.1} parent=1 // pred_check
      _
    $region71: #{tpu_custom_call.1} parent=1 // pred_check_branch
      %151 = sbr.rel (0) target = $region73
    $region72: #{tpu_custom_call.1} parent=1 // pred_region
      %153 = dma.done [#allocation12], 2048
    $region73: #{tpu_custom_call.1} parent=1 // pred_fallthru
      _
    // Predicated region
    $region74: #{tpu_custom_call.1} parent=1 // pred_check
      _
    $region75: #{tpu_custom_call.1} parent=1 // pred_check_branch
      %155 = sbr.rel (0) target = $region77
    $region76: #{tpu_custom_call.1} parent=1 // pred_region
      %157 = dma.done [#allocation15], 1024
    $region77: #{tpu_custom_call.1} parent=1 // pred_fallthru
      _
    %v158 = vld [vmem:[#allocation2] sm:$0xff]
    %v159 = vld [vmem:[#allocation2 + $0x8] sm:$0xff]
    %v160 = vpack.c.bf16 %v158, %v158
    %v161 = vpack.c.bf16 %v159, %v159
    %v162 = vld [vmem:[#allocation5] sm:$0xff]
    %v163 = vld [vmem:[#allocation5 + $0x8] sm:$0xff]
    %v164 = vld [vmem:[#allocation5 + $0x10] sm:$0xff]
    %v165 = vld [vmem:[#allocation5 + $0x18] sm:$0xff]
    %v166 = vld [vmem:[#allocation5 + $0x20] sm:$0xff]
    %v167 = vld [vmem:[#allocation5 + $0x28] sm:$0xff]
    %v168 = vld [vmem:[#allocation5 + $0x30] sm:$0xff]
    %v169 = vld [vmem:[#allocation5 + $0x38] sm:$0xff]
    %v170 = vld [vmem:[#allocation5 + $0x40] sm:$0xff]
    %v171 = vld [vmem:[#allocation5 + $0x48] sm:$0xff]
    %v172 = vld [vmem:[#allocation5 + $0x50] sm:$0xff]
    %v173 = vld [vmem:[#allocation5 + $0x58] sm:$0xff]
    %v174 = vld [vmem:[#allocation5 + $0x60] sm:$0xff]
    %v175 = vld [vmem:[#allocation5 + $0x68] sm:$0xff]
    %v176 = vld [vmem:[#allocation5 + $0x70] sm:$0xff]
    %v177 = vld [vmem:[#allocation5 + $0x78] sm:$0xff]
    %v178 = vld [vmem:[#allocation5 + $0x80] sm:$0xff]
    %v179 = vld [vmem:[#allocation5 + $0x88] sm:$0xff]
    %v180 = vld [vmem:[#allocation5 + $0x90] sm:$0xff]
    %v181 = vld [vmem:[#allocation5 + $0x98] sm:$0xff]
    %v182 = vld [vmem:[#allocation5 + $0xa0] sm:$0xff]
    %v183 = vld [vmem:[#allocation5 + $0xa8] sm:$0xff]
    %v184 = vld [vmem:[#allocation5 + $0xb0] sm:$0xff]
    %v185 = vld [vmem:[#allocation5 + $0xb8] sm:$0xff]
    %v186 = vld [vmem:[#allocation5 + $0xc0] sm:$0xff]
    %v187 = vld [vmem:[#allocation5 + $0xc8] sm:$0xff]
    %v188 = vld [vmem:[#allocation5 + $0xd0] sm:$0xff]
    %v189 = vld [vmem:[#allocation5 + $0xd8] sm:$0xff]
    %v190 = vld [vmem:[#allocation5 + $0xe0] sm:$0xff]
    %v191 = vld [vmem:[#allocation5 + $0xe8] sm:$0xff]
    %v192 = vld [vmem:[#allocation5 + $0xf0] sm:$0xff]
    %v193 = vld [vmem:[#allocation5 + $0xf8] sm:$0xff]
    %v194 = vld [vmem:[#allocation5 + $0x100] sm:$0xff]
    %v195 = vld [vmem:[#allocation5 + $0x108] sm:$0xff]
    %v196 = vld [vmem:[#allocation5 + $0x110] sm:$0xff]
    %v197 = vld [vmem:[#allocation5 + $0x118] sm:$0xff]
    %v198 = vld [vmem:[#allocation5 + $0x120] sm:$0xff]
    %v199 = vld [vmem:[#allocation5 + $0x128] sm:$0xff]
    %v200 = vld [vmem:[#allocation5 + $0x130] sm:$0xff]
    %v201 = vld [vmem:[#allocation5 + $0x138] sm:$0xff]
    %v202 = vld [vmem:[#allocation5 + $0x140] sm:$0xff]
    %v203 = vld [vmem:[#allocation5 + $0x148] sm:$0xff]
    %v204 = vld [vmem:[#allocation5 + $0x150] sm:$0xff]
    %v205 = vld [vmem:[#allocation5 + $0x158] sm:$0xff]
    %v206 = vld [vmem:[#allocation5 + $0x160] sm:$0xff]
    %v207 = vld [vmem:[#allocation5 + $0x168] sm:$0xff]
    %v208 = vld [vmem:[#allocation5 + $0x170] sm:$0xff]
    %v209 = vld [vmem:[#allocation5 + $0x178] sm:$0xff]
    %v210 = vld [vmem:[#allocation5 + $0x180] sm:$0xff]
    %v211 = vld [vmem:[#allocation5 + $0x188] sm:$0xff]
    %v212 = vld [vmem:[#allocation5 + $0x190] sm:$0xff]
    %v213 = vld [vmem:[#allocation5 + $0x198] sm:$0xff]
    %v214 = vld [vmem:[#allocation5 + $0x1a0] sm:$0xff]
    %v215 = vld [vmem:[#allocation5 + $0x1a8] sm:$0xff]
    %v216 = vld [vmem:[#allocation5 + $0x1b0] sm:$0xff]
    %v217 = vld [vmem:[#allocation5 + $0x1b8] sm:$0xff]
    %v218 = vld [vmem:[#allocation5 + $0x1c0] sm:$0xff]
    %v219 = vld [vmem:[#allocation5 + $0x1c8] sm:$0xff]
    %v220 = vld [vmem:[#allocation5 + $0x1d0] sm:$0xff]
    %v221 = vld [vmem:[#allocation5 + $0x1d8] sm:$0xff]
    %v222 = vld [vmem:[#allocation5 + $0x1e0] sm:$0xff]
    %v223 = vld [vmem:[#allocation5 + $0x1e8] sm:$0xff]
    %v224 = vld [vmem:[#allocation5 + $0x1f0] sm:$0xff]
    %v225 = vld [vmem:[#allocation5 + $0x1f8] sm:$0xff]
    %v226 = vld [vmem:[#allocation7] sm:$0xf]
    %v228 = vperm.slane %v226, 0
    %v229 = vperm.slane %v226, 1
    %v230 = vperm.slane %v226, 2
    %v231 = vperm.slane %v226, 3
    %v300 = vunpack.c.l.b16 %v162
    %v301 = vunpack.c.h.b16 %v162
    %v302 = vunpack.c.l.b16 %v163
    %v303 = vunpack.c.h.b16 %v163
    %v304 = vunpack.c.l.b16 %v164
    %v305 = vunpack.c.h.b16 %v164
    %v306 = vunpack.c.l.b16 %v165
    %v307 = vunpack.c.h.b16 %v165
    %v308 = vunpack.c.l.b16 %v166
    %v309 = vunpack.c.h.b16 %v166
    %v310 = vunpack.c.l.b16 %v167
    %v311 = vunpack.c.h.b16 %v167
    %v312 = vunpack.c.l.b16 %v168
    %v313 = vunpack.c.h.b16 %v168
    %v314 = vunpack.c.l.b16 %v169
    %v315 = vunpack.c.h.b16 %v169
    %v316 = vunpack.c.l.b16 %v170
    %v317 = vunpack.c.h.b16 %v170
    %v318 = vunpack.c.l.b16 %v171
    %v319 = vunpack.c.h.b16 %v171
    %v320 = vunpack.c.l.b16 %v172
    %v321 = vunpack.c.h.b16 %v172
    %v322 = vunpack.c.l.b16 %v173
    %v323 = vunpack.c.h.b16 %v173
    %v324 = vunpack.c.l.b16 %v174
    %v325 = vunpack.c.h.b16 %v174
    %v326 = vunpack.c.l.b16 %v175
    %v327 = vunpack.c.h.b16 %v175
    %v328 = vunpack.c.l.b16 %v176
    %v329 = vunpack.c.h.b16 %v176
    %v330 = vunpack.c.l.b16 %v177
    %v331 = vunpack.c.h.b16 %v177
    %v332 = vunpack.c.l.b16 %v178
    %v333 = vunpack.c.h.b16 %v178
    %v334 = vunpack.c.l.b16 %v179
    %v335 = vunpack.c.h.b16 %v179
    %v336 = vunpack.c.l.b16 %v180
    %v337 = vunpack.c.h.b16 %v180
    %v338 = vunpack.c.l.b16 %v181
    %v339 = vunpack.c.h.b16 %v181
    %v340 = vunpack.c.l.b16 %v182
    %v341 = vunpack.c.h.b16 %v182
    %v342 = vunpack.c.l.b16 %v183
    %v343 = vunpack.c.h.b16 %v183
    %v344 = vunpack.c.l.b16 %v184
    %v345 = vunpack.c.h.b16 %v184
    %v346 = vunpack.c.l.b16 %v185
    %v347 = vunpack.c.h.b16 %v185
    %v348 = vunpack.c.l.b16 %v186
    %v349 = vunpack.c.h.b16 %v186
    %v350 = vunpack.c.l.b16 %v187
    %v351 = vunpack.c.h.b16 %v187
    %v352 = vunpack.c.l.b16 %v188
    %v353 = vunpack.c.h.b16 %v188
    %v354 = vunpack.c.l.b16 %v189
    %v355 = vunpack.c.h.b16 %v189
    %v356 = vunpack.c.l.b16 %v190
    %v357 = vunpack.c.h.b16 %v190
    %v358 = vunpack.c.l.b16 %v191
    %v359 = vunpack.c.h.b16 %v191
    %v360 = vunpack.c.l.b16 %v192
    %v361 = vunpack.c.h.b16 %v192
    %v362 = vunpack.c.l.b16 %v193
    %v363 = vunpack.c.h.b16 %v193
    %v364 = vunpack.c.l.b16 %v194
    %v365 = vunpack.c.h.b16 %v194
    %v366 = vunpack.c.l.b16 %v195
    %v367 = vunpack.c.h.b16 %v195
    %v368 = vunpack.c.l.b16 %v196
    %v369 = vunpack.c.h.b16 %v196
    %v370 = vunpack.c.l.b16 %v197
    %v371 = vunpack.c.h.b16 %v197
    %v372 = vunpack.c.l.b16 %v198
    %v373 = vunpack.c.h.b16 %v198
    %v374 = vunpack.c.l.b16 %v199
    %v375 = vunpack.c.h.b16 %v199
    %v376 = vunpack.c.l.b16 %v200
    %v377 = vunpack.c.h.b16 %v200
    %v378 = vunpack.c.l.b16 %v201
    %v379 = vunpack.c.h.b16 %v201
    %v380 = vunpack.c.l.b16 %v202
    %v381 = vunpack.c.h.b16 %v202
    %v382 = vunpack.c.l.b16 %v203
    %v383 = vunpack.c.h.b16 %v203
    %v384 = vunpack.c.l.b16 %v204
    %v385 = vunpack.c.h.b16 %v204
    %v386 = vunpack.c.l.b16 %v205
    %v387 = vunpack.c.h.b16 %v205
    %v388 = vunpack.c.l.b16 %v206
    %v389 = vunpack.c.h.b16 %v206
    %v390 = vunpack.c.l.b16 %v207
    %v391 = vunpack.c.h.b16 %v207
    %v392 = vunpack.c.l.b16 %v208
    %v393 = vunpack.c.h.b16 %v208
    %v394 = vunpack.c.l.b16 %v209
    %v395 = vunpack.c.h.b16 %v209
    %v396 = vunpack.c.l.b16 %v210
    %v397 = vunpack.c.h.b16 %v210
    %v398 = vunpack.c.l.b16 %v211
    %v399 = vunpack.c.h.b16 %v211
    %v400 = vunpack.c.l.b16 %v212
    %v401 = vunpack.c.h.b16 %v212
    %v402 = vunpack.c.l.b16 %v213
    %v403 = vunpack.c.h.b16 %v213
    %v404 = vunpack.c.l.b16 %v214
    %v405 = vunpack.c.h.b16 %v214
    %v406 = vunpack.c.l.b16 %v215
    %v407 = vunpack.c.h.b16 %v215
    %v408 = vunpack.c.l.b16 %v216
    %v409 = vunpack.c.h.b16 %v216
    %v410 = vunpack.c.l.b16 %v217
    %v411 = vunpack.c.h.b16 %v217
    %v412 = vunpack.c.l.b16 %v218
    %v413 = vunpack.c.h.b16 %v218
    %v414 = vunpack.c.l.b16 %v219
    %v415 = vunpack.c.h.b16 %v219
    %v416 = vunpack.c.l.b16 %v220
    %v417 = vunpack.c.h.b16 %v220
    %v418 = vunpack.c.l.b16 %v221
    %v419 = vunpack.c.h.b16 %v221
    %v420 = vunpack.c.l.b16 %v222
    %v421 = vunpack.c.h.b16 %v222
    %v422 = vunpack.c.l.b16 %v223
    %v423 = vunpack.c.h.b16 %v223
    %v424 = vunpack.c.l.b16 %v224
    %v425 = vunpack.c.h.b16 %v224
    %v426 = vunpack.c.l.b16 %v225
    %v427 = vunpack.c.h.b16 %v225
    %v428 = vpack.c.b16 %v304, %v300
    %v429 = vpack.c.b16 %v305, %v301
    %v430 = vpack.c.b16 %v306, %v302
    %v431 = vpack.c.b16 %v307, %v303
    %v432 = vpack.c.b16 %v312, %v308
    %v433 = vpack.c.b16 %v313, %v309
    %v434 = vpack.c.b16 %v314, %v310
    %v435 = vpack.c.b16 %v315, %v311
    %v436 = vpack.c.b16 %v320, %v316
    %v437 = vpack.c.b16 %v321, %v317
    %v438 = vpack.c.b16 %v322, %v318
    %v439 = vpack.c.b16 %v323, %v319
    %v440 = vpack.c.b16 %v328, %v324
    %v441 = vpack.c.b16 %v329, %v325
    %v442 = vpack.c.b16 %v330, %v326
    %v443 = vpack.c.b16 %v331, %v327
    %v444 = vpack.c.b16 %v336, %v332
    %v445 = vpack.c.b16 %v337, %v333
    %v446 = vpack.c.b16 %v338, %v334
    %v447 = vpack.c.b16 %v339, %v335
    %v448 = vpack.c.b16 %v344, %v340
    %v449 = vpack.c.b16 %v345, %v341
    %v450 = vpack.c.b16 %v346, %v342
    %v451 = vpack.c.b16 %v347, %v343
    %v452 = vpack.c.b16 %v352, %v348
    %v453 = vpack.c.b16 %v353, %v349
    %v454 = vpack.c.b16 %v354, %v350
    %v455 = vpack.c.b16 %v355, %v351
    %v456 = vpack.c.b16 %v360, %v356
    %v457 = vpack.c.b16 %v361, %v357
    %v458 = vpack.c.b16 %v362, %v358
    %v459 = vpack.c.b16 %v363, %v359
    %v460 = vpack.c.b16 %v368, %v364
    %v461 = vpack.c.b16 %v369, %v365
    %v462 = vpack.c.b16 %v370, %v366
    %v463 = vpack.c.b16 %v371, %v367
    %v464 = vpack.c.b16 %v376, %v372
    %v465 = vpack.c.b16 %v377, %v373
    %v466 = vpack.c.b16 %v378, %v374
    %v467 = vpack.c.b16 %v379, %v375
    %v468 = vpack.c.b16 %v384, %v380
    %v469 = vpack.c.b16 %v385, %v381
    %v470 = vpack.c.b16 %v386, %v382
    %v471 = vpack.c.b16 %v387, %v383
    %v472 = vpack.c.b16 %v392, %v388
    %v473 = vpack.c.b16 %v393, %v389
    %v474 = vpack.c.b16 %v394, %v390
    %v475 = vpack.c.b16 %v395, %v391
    %v476 = vpack.c.b16 %v400, %v396
    %v477 = vpack.c.b16 %v401, %v397
    %v478 = vpack.c.b16 %v402, %v398
    %v479 = vpack.c.b16 %v403, %v399
    %v480 = vpack.c.b16 %v408, %v404
    %v481 = vpack.c.b16 %v409, %v405
    %v482 = vpack.c.b16 %v410, %v406
    %v483 = vpack.c.b16 %v411, %v407
    %v484 = vpack.c.b16 %v416, %v412
    %v485 = vpack.c.b16 %v417, %v413
    %v486 = vpack.c.b16 %v418, %v414
    %v487 = vpack.c.b16 %v419, %v415
    %v488 = vpack.c.b16 %v424, %v420
    %v489 = vpack.c.b16 %v425, %v421
    %v490 = vpack.c.b16 %v426, %v422
    %v491 = vpack.c.b16 %v427, %v423
    %556 = vmatpush.bf16.msra.mxu0 %v456
    %557 = vmatpush.bf16.msra.mxu0 %v452
    %558 = vmatpush.bf16.msra.mxu0 %v448
    %559 = vmatpush.bf16.msra.mxu0 %v444
    %560 = vmatpush.bf16.msra.mxu0 %v440
    %561 = vmatpush.bf16.msra.mxu0 %v436
    %562 = vmatpush.bf16.msra.mxu0 %v432
    %563 = vmatpush.bf16.msra.mxu0 %v428
    %564 = vmatmul.bf16.gmra.mxu0 %v160
    %v565 = vpop.f32.mrf.mxu0
    %v566 = vadd.f32 %v228, %v565
    %v567 = vpop.f32.mrf.mxu0
    %568 = vdwg.mxu0
    %569 = vmatpush.bf16.msra.mxu0 %v488
    %570 = vmatpush.bf16.msra.mxu0 %v484
    %571 = vmatpush.bf16.msra.mxu0 %v480
    %572 = vmatpush.bf16.msra.mxu0 %v476
    %573 = vmatpush.bf16.msra.mxu0 %v472
    %574 = vmatpush.bf16.msra.mxu0 %v468
    %575 = vmatpush.bf16.msra.mxu0 %v464
    %576 = vmatpush.bf16.msra.mxu0 %v460
    %577 = vmatmul.bf16.gmra.mxu0 %v161
    %v578 = vpop.f32.mrf.mxu0
    %v579 = vadd.f32 %v566, %v578
    %v580 = vpop.f32.mrf.mxu0
    %581 = vdwg.mxu0
    %582 = vmatpush.bf16.msra.mxu0 %v457
    %583 = vmatpush.bf16.msra.mxu0 %v453
    %584 = vmatpush.bf16.msra.mxu0 %v449
    %585 = vmatpush.bf16.msra.mxu0 %v445
    %586 = vmatpush.bf16.msra.mxu0 %v441
    %587 = vmatpush.bf16.msra.mxu0 %v437
    %588 = vmatpush.bf16.msra.mxu0 %v433
    %589 = vmatpush.bf16.msra.mxu0 %v429
    %590 = vmatmul.bf16.gmra.mxu0 %v160
    %v591 = vpop.f32.mrf.mxu0
    %v592 = vadd.f32 %v229, %v591
    %v593 = vpop.f32.mrf.mxu0
    %594 = vdwg.mxu0
    %595 = vmatpush.bf16.msra.mxu0 %v489
    %596 = vmatpush.bf16.msra.mxu0 %v485
    %597 = vmatpush.bf16.msra.mxu0 %v481
    %598 = vmatpush.bf16.msra.mxu0 %v477
    %599 = vmatpush.bf16.msra.mxu0 %v473
    %600 = vmatpush.bf16.msra.mxu0 %v469
    %601 = vmatpush.bf16.msra.mxu0 %v465
    %602 = vmatpush.bf16.msra.mxu0 %v461
    %603 = vmatmul.bf16.gmra.mxu0 %v161
    %v604 = vpop.f32.mrf.mxu0
    %v605 = vadd.f32 %v592, %v604
    %v606 = vpop.f32.mrf.mxu0
    %607 = vdwg.mxu0
    %608 = vmatpush.bf16.msra.mxu0 %v458
    %609 = vmatpush.bf16.msra.mxu0 %v454
    %610 = vmatpush.bf16.msra.mxu0 %v450
    %611 = vmatpush.bf16.msra.mxu0 %v446
    %612 = vmatpush.bf16.msra.mxu0 %v442
    %613 = vmatpush.bf16.msra.mxu0 %v438
    %614 = vmatpush.bf16.msra.mxu0 %v434
    %615 = vmatpush.bf16.msra.mxu0 %v430
    %616 = vmatmul.bf16.gmra.mxu0 %v160
    %v617 = vpop.f32.mrf.mxu0
    %v618 = vadd.f32 %v230, %v617
    %v619 = vpop.f32.mrf.mxu0
    %620 = vdwg.mxu0
    %621 = vmatpush.bf16.msra.mxu0 %v490
    %622 = vmatpush.bf16.msra.mxu0 %v486
    %623 = vmatpush.bf16.msra.mxu0 %v482
    %624 = vmatpush.bf16.msra.mxu0 %v478
    %625 = vmatpush.bf16.msra.mxu0 %v474
    %626 = vmatpush.bf16.msra.mxu0 %v470
    %627 = vmatpush.bf16.msra.mxu0 %v466
    %628 = vmatpush.bf16.msra.mxu0 %v462
    %629 = vmatmul.bf16.gmra.mxu0 %v161
    %v630 = vpop.f32.mrf.mxu0
    %v631 = vadd.f32 %v618, %v630
    %v632 = vpop.f32.mrf.mxu0
    %633 = vdwg.mxu0
    %634 = vmatpush.bf16.msra.mxu0 %v459
    %635 = vmatpush.bf16.msra.mxu0 %v455
    %636 = vmatpush.bf16.msra.mxu0 %v451
    %637 = vmatpush.bf16.msra.mxu0 %v447
    %638 = vmatpush.bf16.msra.mxu0 %v443
    %639 = vmatpush.bf16.msra.mxu0 %v439
    %640 = vmatpush.bf16.msra.mxu0 %v435
    %641 = vmatpush.bf16.msra.mxu0 %v431
    %642 = vmatmul.bf16.gmra.mxu0 %v160
    %v643 = vpop.f32.mrf.mxu0
    %v644 = vadd.f32 %v231, %v643
    %v645 = vpop.f32.mrf.mxu0
    %646 = vdwg.mxu0
    %647 = vmatpush.bf16.msra.mxu0 %v491
    %648 = vmatpush.bf16.msra.mxu0 %v487
    %649 = vmatpush.bf16.msra.mxu0 %v483
    %650 = vmatpush.bf16.msra.mxu0 %v479
    %651 = vmatpush.bf16.msra.mxu0 %v475
    %652 = vmatpush.bf16.msra.mxu0 %v471
    %653 = vmatpush.bf16.msra.mxu0 %v467
    %654 = vmatpush.bf16.msra.mxu0 %v463
    %655 = vmatmul.bf16.gmra.mxu0 %v161
    %v656 = vpop.f32.mrf.mxu0
    %v657 = vadd.f32 %v644, %v656
    %v658 = vpop.f32.mrf.mxu0
    %659 = vdwg.mxu0
    %vm660 = vcmp.gt.f32.partialorder %v579, 0.0
    %vm661 = vcmp.gt.f32.partialorder %v605, 0.0
    %vm662 = vcmp.gt.f32.partialorder %v631, 0.0
    %vm663 = vcmp.gt.f32.partialorder %v657, 0.0
    %v664 = vmul.f32 %v579, 0.2
    %v665 = vmul.f32 %v605, 0.2
    %v666 = vmul.f32 %v631, 0.2
    %v667 = vmul.f32 %v657, 0.2
    %v668 = vsel %vm660, %v579, %v664
    %v669 = vsel %vm661, %v605, %v665
    %v670 = vsel %vm662, %v631, %v666
    %v671 = vsel %vm663, %v657, %v667
    %v672 = vpack.c.bf16 %v668, %v668
    %v673 = vpack.c.bf16 %v669, %v669
    %v674 = vpack.c.bf16 %v670, %v670
    %v675 = vpack.c.bf16 %v671, %v671
    %v676 = vld [vmem:[#allocation8] sm:$0xff]
    %v677 = vld [vmem:[#allocation8 + $0x8] sm:$0xff]
    %v678 = vld [vmem:[#allocation8 + $0x10] sm:$0xff]
    %v679 = vld [vmem:[#allocation8 + $0x18] sm:$0xff]
    %v680 = vld [vmem:[#allocation8 + $0x20] sm:$0xff]
    %v681 = vld [vmem:[#allocation8 + $0x28] sm:$0xff]
    %v682 = vld [vmem:[#allocation8 + $0x30] sm:$0xff]
    %v683 = vld [vmem:[#allocation8 + $0x38] sm:$0xff]
    %v684 = vld [vmem:[#allocation8 + $0x40] sm:$0xff]
    %v685 = vld [vmem:[#allocation8 + $0x48] sm:$0xff]
    %v686 = vld [vmem:[#allocation8 + $0x50] sm:$0xff]
    %v687 = vld [vmem:[#allocation8 + $0x58] sm:$0xff]
    %v688 = vld [vmem:[#allocation8 + $0x60] sm:$0xff]
    %v689 = vld [vmem:[#allocation8 + $0x68] sm:$0xff]
    %v690 = vld [vmem:[#allocation8 + $0x70] sm:$0xff]
    %v691 = vld [vmem:[#allocation8 + $0x78] sm:$0xff]
    %v692 = vld [vmem:[#allocation8 + $0x80] sm:$0xff]
    %v693 = vld [vmem:[#allocation8 + $0x88] sm:$0xff]
    %v694 = vld [vmem:[#allocation8 + $0x90] sm:$0xff]
    %v695 = vld [vmem:[#allocation8 + $0x98] sm:$0xff]
    %v696 = vld [vmem:[#allocation8 + $0xa0] sm:$0xff]
    %v697 = vld [vmem:[#allocation8 + $0xa8] sm:$0xff]
    %v698 = vld [vmem:[#allocation8 + $0xb0] sm:$0xff]
    %v699 = vld [vmem:[#allocation8 + $0xb8] sm:$0xff]
    %v700 = vld [vmem:[#allocation8 + $0xc0] sm:$0xff]
    %v701 = vld [vmem:[#allocation8 + $0xc8] sm:$0xff]
    %v702 = vld [vmem:[#allocation8 + $0xd0] sm:$0xff]
    %v703 = vld [vmem:[#allocation8 + $0xd8] sm:$0xff]
    %v704 = vld [vmem:[#allocation8 + $0xe0] sm:$0xff]
    %v705 = vld [vmem:[#allocation8 + $0xe8] sm:$0xff]
    %v706 = vld [vmem:[#allocation8 + $0xf0] sm:$0xff]
    %v707 = vld [vmem:[#allocation8 + $0xf8] sm:$0xff]
    %v708 = vld [vmem:[#allocation8 + $0x100] sm:$0xff]
    %v709 = vld [vmem:[#allocation8 + $0x108] sm:$0xff]
    %v710 = vld [vmem:[#allocation8 + $0x110] sm:$0xff]
    %v711 = vld [vmem:[#allocation8 + $0x118] sm:$0xff]
    %v712 = vld [vmem:[#allocation8 + $0x120] sm:$0xff]
    %v713 = vld [vmem:[#allocation8 + $0x128] sm:$0xff]
    %v714 = vld [vmem:[#allocation8 + $0x130] sm:$0xff]
    %v715 = vld [vmem:[#allocation8 + $0x138] sm:$0xff]
    %v716 = vld [vmem:[#allocation8 + $0x140] sm:$0xff]
    %v717 = vld [vmem:[#allocation8 + $0x148] sm:$0xff]
    %v718 = vld [vmem:[#allocation8 + $0x150] sm:$0xff]
    %v719 = vld [vmem:[#allocation8 + $0x158] sm:$0xff]
    %v720 = vld [vmem:[#allocation8 + $0x160] sm:$0xff]
    %v721 = vld [vmem:[#allocation8 + $0x168] sm:$0xff]
    %v722 = vld [vmem:[#allocation8 + $0x170] sm:$0xff]
    %v723 = vld [vmem:[#allocation8 + $0x178] sm:$0xff]
    %v724 = vld [vmem:[#allocation8 + $0x180] sm:$0xff]
    %v725 = vld [vmem:[#allocation8 + $0x188] sm:$0xff]
    %v726 = vld [vmem:[#allocation8 + $0x190] sm:$0xff]
    %v727 = vld [vmem:[#allocation8 + $0x198] sm:$0xff]
    %v728 = vld [vmem:[#allocation8 + $0x1a0] sm:$0xff]
    %v729 = vld [vmem:[#allocation8 + $0x1a8] sm:$0xff]
    %v730 = vld [vmem:[#allocation8 + $0x1b0] sm:$0xff]
    %v731 = vld [vmem:[#allocation8 + $0x1b8] sm:$0xff]
    %v732 = vld [vmem:[#allocation8 + $0x1c0] sm:$0xff]
    %v733 = vld [vmem:[#allocation8 + $0x1c8] sm:$0xff]
    %v734 = vld [vmem:[#allocation8 + $0x1d0] sm:$0xff]
    %v735 = vld [vmem:[#allocation8 + $0x1d8] sm:$0xff]
    %v736 = vld [vmem:[#allocation8 + $0x1e0] sm:$0xff]
    %v737 = vld [vmem:[#allocation8 + $0x1e8] sm:$0xff]
    %v738 = vld [vmem:[#allocation8 + $0x1f0] sm:$0xff]
    %v739 = vld [vmem:[#allocation8 + $0x1f8] sm:$0xff]
    %v740 = vld [vmem:[#allocation8 + $0x200] sm:$0xff]
    %v741 = vld [vmem:[#allocation8 + $0x208] sm:$0xff]
    %v742 = vld [vmem:[#allocation8 + $0x210] sm:$0xff]
    %v743 = vld [vmem:[#allocation8 + $0x218] sm:$0xff]
    %v744 = vld [vmem:[#allocation8 + $0x220] sm:$0xff]
    %v745 = vld [vmem:[#allocation8 + $0x228] sm:$0xff]
    %v746 = vld [vmem:[#allocation8 + $0x230] sm:$0xff]
    %v747 = vld [vmem:[#allocation8 + $0x238] sm:$0xff]
    %v748 = vld [vmem:[#allocation8 + $0x240] sm:$0xff]
    %v749 = vld [vmem:[#allocation8 + $0x248] sm:$0xff]
    %v750 = vld [vmem:[#allocation8 + $0x250] sm:$0xff]
    %v751 = vld [vmem:[#allocation8 + $0x258] sm:$0xff]
    %v752 = vld [vmem:[#allocation8 + $0x260] sm:$0xff]
    %v753 = vld [vmem:[#allocation8 + $0x268] sm:$0xff]
    %v754 = vld [vmem:[#allocation8 + $0x270] sm:$0xff]
    %v755 = vld [vmem:[#allocation8 + $0x278] sm:$0xff]
    %v756 = vld [vmem:[#allocation8 + $0x280] sm:$0xff]
    %v757 = vld [vmem:[#allocation8 + $0x288] sm:$0xff]
    %v758 = vld [vmem:[#allocation8 + $0x290] sm:$0xff]
    %v759 = vld [vmem:[#allocation8 + $0x298] sm:$0xff]
    %v760 = vld [vmem:[#allocation8 + $0x2a0] sm:$0xff]
    %v761 = vld [vmem:[#allocation8 + $0x2a8] sm:$0xff]
    %v762 = vld [vmem:[#allocation8 + $0x2b0] sm:$0xff]
    %v763 = vld [vmem:[#allocation8 + $0x2b8] sm:$0xff]
    %v764 = vld [vmem:[#allocation8 + $0x2c0] sm:$0xff]
    %v765 = vld [vmem:[#allocation8 + $0x2c8] sm:$0xff]
    %v766 = vld [vmem:[#allocation8 + $0x2d0] sm:$0xff]
    %v767 = vld [vmem:[#allocation8 + $0x2d8] sm:$0xff]
    %v768 = vld [vmem:[#allocation8 + $0x2e0] sm:$0xff]
    %v769 = vld [vmem:[#allocation8 + $0x2e8] sm:$0xff]
    %v770 = vld [vmem:[#allocation8 + $0x2f0] sm:$0xff]
    %v771 = vld [vmem:[#allocation8 + $0x2f8] sm:$0xff]
    %v772 = vld [vmem:[#allocation8 + $0x300] sm:$0xff]
    %v773 = vld [vmem:[#allocation8 + $0x308] sm:$0xff]
    %v774 = vld [vmem:[#allocation8 + $0x310] sm:$0xff]
    %v775 = vld [vmem:[#allocation8 + $0x318] sm:$0xff]
    %v776 = vld [vmem:[#allocation8 + $0x320] sm:$0xff]
    %v777 = vld [vmem:[#allocation8 + $0x328] sm:$0xff]
    %v778 = vld [vmem:[#allocation8 + $0x330] sm:$0xff]
    %v779 = vld [vmem:[#allocation8 + $0x338] sm:$0xff]
    %v780 = vld [vmem:[#allocation8 + $0x340] sm:$0xff]
    %v781 = vld [vmem:[#allocation8 + $0x348] sm:$0xff]
    %v782 = vld [vmem:[#allocation8 + $0x350] sm:$0xff]
    %v783 = vld [vmem:[#allocation8 + $0x358] sm:$0xff]
    %v784 = vld [vmem:[#allocation8 + $0x360] sm:$0xff]
    %v785 = vld [vmem:[#allocation8 + $0x368] sm:$0xff]
    %v786 = vld [vmem:[#allocation8 + $0x370] sm:$0xff]
    %v787 = vld [vmem:[#allocation8 + $0x378] sm:$0xff]
    %v788 = vld [vmem:[#allocation8 + $0x380] sm:$0xff]
    %v789 = vld [vmem:[#allocation8 + $0x388] sm:$0xff]
    %v790 = vld [vmem:[#allocation8 + $0x390] sm:$0xff]
    %v791 = vld [vmem:[#allocation8 + $0x398] sm:$0xff]
    %v792 = vld [vmem:[#allocation8 + $0x3a0] sm:$0xff]
    %v793 = vld [vmem:[#allocation8 + $0x3a8] sm:$0xff]
    %v794 = vld [vmem:[#allocation8 + $0x3b0] sm:$0xff]
    %v795 = vld [vmem:[#allocation8 + $0x3b8] sm:$0xff]
    %v796 = vld [vmem:[#allocation8 + $0x3c0] sm:$0xff]
    %v797 = vld [vmem:[#allocation8 + $0x3c8] sm:$0xff]
    %v798 = vld [vmem:[#allocation8 + $0x3d0] sm:$0xff]
    %v799 = vld [vmem:[#allocation8 + $0x3d8] sm:$0xff]
    %v800 = vld [vmem:[#allocation8 + $0x3e0] sm:$0xff]
    %v801 = vld [vmem:[#allocation8 + $0x3e8] sm:$0xff]
    %v802 = vld [vmem:[#allocation8 + $0x3f0] sm:$0xff]
    %v803 = vld [vmem:[#allocation8 + $0x3f8] sm:$0xff]
    %v804 = vld [vmem:[#allocation10] sm:$0xf]
    %v806 = vperm.slane %v804, 0
    %v807 = vperm.slane %v804, 1
    %v808 = vperm.slane %v804, 2
    %v809 = vperm.slane %v804, 3
    %v942 = vunpack.c.l.b16 %v676
    %v943 = vunpack.c.h.b16 %v676
    %v944 = vunpack.c.l.b16 %v677
    %v945 = vunpack.c.h.b16 %v677
    %v946 = vunpack.c.l.b16 %v678
    %v947 = vunpack.c.h.b16 %v678
    %v948 = vunpack.c.l.b16 %v679
    %v949 = vunpack.c.h.b16 %v679
    %v950 = vunpack.c.l.b16 %v680
    %v951 = vunpack.c.h.b16 %v680
    %v952 = vunpack.c.l.b16 %v681
    %v953 = vunpack.c.h.b16 %v681
    %v954 = vunpack.c.l.b16 %v682
    %v955 = vunpack.c.h.b16 %v682
    %v956 = vunpack.c.l.b16 %v683
    %v957 = vunpack.c.h.b16 %v683
    %v958 = vunpack.c.l.b16 %v684
    %v959 = vunpack.c.h.b16 %v684
    %v960 = vunpack.c.l.b16 %v685
    %v961 = vunpack.c.h.b16 %v685
    %v962 = vunpack.c.l.b16 %v686
    %v963 = vunpack.c.h.b16 %v686
    %v964 = vunpack.c.l.b16 %v687
    %v965 = vunpack.c.h.b16 %v687
    %v966 = vunpack.c.l.b16 %v688
    %v967 = vunpack.c.h.b16 %v688
    %v968 = vunpack.c.l.b16 %v689
    %v969 = vunpack.c.h.b16 %v689
    %v970 = vunpack.c.l.b16 %v690
    %v971 = vunpack.c.h.b16 %v690
    %v972 = vunpack.c.l.b16 %v691
    %v973 = vunpack.c.h.b16 %v691
    %v974 = vunpack.c.l.b16 %v692
    %v975 = vunpack.c.h.b16 %v692
    %v976 = vunpack.c.l.b16 %v693
    %v977 = vunpack.c.h.b16 %v693
    %v978 = vunpack.c.l.b16 %v694
    %v979 = vunpack.c.h.b16 %v694
    %v980 = vunpack.c.l.b16 %v695
    %v981 = vunpack.c.h.b16 %v695
    %v982 = vunpack.c.l.b16 %v696
    %v983 = vunpack.c.h.b16 %v696
    %v984 = vunpack.c.l.b16 %v697
    %v985 = vunpack.c.h.b16 %v697
    %v986 = vunpack.c.l.b16 %v698
    %v987 = vunpack.c.h.b16 %v698
    %v988 = vunpack.c.l.b16 %v699
    %v989 = vunpack.c.h.b16 %v699
    %v990 = vunpack.c.l.b16 %v700
    %v991 = vunpack.c.h.b16 %v700
    %v992 = vunpack.c.l.b16 %v701
    %v993 = vunpack.c.h.b16 %v701
    %v994 = vunpack.c.l.b16 %v702
    %v995 = vunpack.c.h.b16 %v702
    %v996 = vunpack.c.l.b16 %v703
    %v997 = vunpack.c.h.b16 %v703
    %v998 = vunpack.c.l.b16 %v704
    %v999 = vunpack.c.h.b16 %v704
    %v1000 = vunpack.c.l.b16 %v705
    %v1001 = vunpack.c.h.b16 %v705
    %v1002 = vunpack.c.l.b16 %v706
    %v1003 = vunpack.c.h.b16 %v706
    %v1004 = vunpack.c.l.b16 %v707
    %v1005 = vunpack.c.h.b16 %v707
    %v1006 = vunpack.c.l.b16 %v708
    %v1007 = vunpack.c.h.b16 %v708
    %v1008 = vunpack.c.l.b16 %v709
    %v1009 = vunpack.c.h.b16 %v709
    %v1010 = vunpack.c.l.b16 %v710
    %v1011 = vunpack.c.h.b16 %v710
    %v1012 = vunpack.c.l.b16 %v711
    %v1013 = vunpack.c.h.b16 %v711
    %v1014 = vunpack.c.l.b16 %v712
    %v1015 = vunpack.c.h.b16 %v712
    %v1016 = vunpack.c.l.b16 %v713
    %v1017 = vunpack.c.h.b16 %v713
    %v1018 = vunpack.c.l.b16 %v714
    %v1019 = vunpack.c.h.b16 %v714
    %v1020 = vunpack.c.l.b16 %v715
    %v1021 = vunpack.c.h.b16 %v715
    %v1022 = vunpack.c.l.b16 %v716
    %v1023 = vunpack.c.h.b16 %v716
    %v1024 = vunpack.c.l.b16 %v717
    %v1025 = vunpack.c.h.b16 %v717
    %v1026 = vunpack.c.l.b16 %v718
    %v1027 = vunpack.c.h.b16 %v718
    %v1028 = vunpack.c.l.b16 %v719
    %v1029 = vunpack.c.h.b16 %v719
    %v1030 = vunpack.c.l.b16 %v720
    %v1031 = vunpack.c.h.b16 %v720
    %v1032 = vunpack.c.l.b16 %v721
    %v1033 = vunpack.c.h.b16 %v721
    %v1034 = vunpack.c.l.b16 %v722
    %v1035 = vunpack.c.h.b16 %v722
    %v1036 = vunpack.c.l.b16 %v723
    %v1037 = vunpack.c.h.b16 %v723
    %v1038 = vunpack.c.l.b16 %v724
    %v1039 = vunpack.c.h.b16 %v724
    %v1040 = vunpack.c.l.b16 %v725
    %v1041 = vunpack.c.h.b16 %v725
    %v1042 = vunpack.c.l.b16 %v726
    %v1043 = vunpack.c.h.b16 %v726
    %v1044 = vunpack.c.l.b16 %v727
    %v1045 = vunpack.c.h.b16 %v727
    %v1046 = vunpack.c.l.b16 %v728
    %v1047 = vunpack.c.h.b16 %v728
    %v1048 = vunpack.c.l.b16 %v729
    %v1049 = vunpack.c.h.b16 %v729
    %v1050 = vunpack.c.l.b16 %v730
    %v1051 = vunpack.c.h.b16 %v730
    %v1052 = vunpack.c.l.b16 %v731
    %v1053 = vunpack.c.h.b16 %v731
    %v1054 = vunpack.c.l.b16 %v732
    %v1055 = vunpack.c.h.b16 %v732
    %v1056 = vunpack.c.l.b16 %v733
    %v1057 = vunpack.c.h.b16 %v733
    %v1058 = vunpack.c.l.b16 %v734
    %v1059 = vunpack.c.h.b16 %v734
    %v1060 = vunpack.c.l.b16 %v735
    %v1061 = vunpack.c.h.b16 %v735
    %v1062 = vunpack.c.l.b16 %v736
    %v1063 = vunpack.c.h.b16 %v736
    %v1064 = vunpack.c.l.b16 %v737
    %v1065 = vunpack.c.h.b16 %v737
    %v1066 = vunpack.c.l.b16 %v738
    %v1067 = vunpack.c.h.b16 %v738
    %v1068 = vunpack.c.l.b16 %v739
    %v1069 = vunpack.c.h.b16 %v739
    %v1070 = vunpack.c.l.b16 %v740
    %v1071 = vunpack.c.h.b16 %v740
    %v1072 = vunpack.c.l.b16 %v741
    %v1073 = vunpack.c.h.b16 %v741
    %v1074 = vunpack.c.l.b16 %v742
    %v1075 = vunpack.c.h.b16 %v742
    %v1076 = vunpack.c.l.b16 %v743
    %v1077 = vunpack.c.h.b16 %v743
    %v1078 = vunpack.c.l.b16 %v744
    %v1079 = vunpack.c.h.b16 %v744
    %v1080 = vunpack.c.l.b16 %v745
    %v1081 = vunpack.c.h.b16 %v745
    %v1082 = vunpack.c.l.b16 %v746
    %v1083 = vunpack.c.h.b16 %v746
    %v1084 = vunpack.c.l.b16 %v747
    %v1085 = vunpack.c.h.b16 %v747
    %v1086 = vunpack.c.l.b16 %v748
    %v1087 = vunpack.c.h.b16 %v748
    %v1088 = vunpack.c.l.b16 %v749
    %v1089 = vunpack.c.h.b16 %v749
    %v1090 = vunpack.c.l.b16 %v750
    %v1091 = vunpack.c.h.b16 %v750
    %v1092 = vunpack.c.l.b16 %v751
    %v1093 = vunpack.c.h.b16 %v751
    %v1094 = vunpack.c.l.b16 %v752
    %v1095 = vunpack.c.h.b16 %v752
    %v1096 = vunpack.c.l.b16 %v753
    %v1097 = vunpack.c.h.b16 %v753
    %v1098 = vunpack.c.l.b16 %v754
    %v1099 = vunpack.c.h.b16 %v754
    %v1100 = vunpack.c.l.b16 %v755
    %v1101 = vunpack.c.h.b16 %v755
    %v1102 = vunpack.c.l.b16 %v756
    %v1103 = vunpack.c.h.b16 %v756
    %v1104 = vunpack.c.l.b16 %v757
    %v1105 = vunpack.c.h.b16 %v757
    %v1106 = vunpack.c.l.b16 %v758
    %v1107 = vunpack.c.h.b16 %v758
    %v1108 = vunpack.c.l.b16 %v759
    %v1109 = vunpack.c.h.b16 %v759
    %v1110 = vunpack.c.l.b16 %v760
    %v1111 = vunpack.c.h.b16 %v760
    %v1112 = vunpack.c.l.b16 %v761
    %v1113 = vunpack.c.h.b16 %v761
    %v1114 = vunpack.c.l.b16 %v762
    %v1115 = vunpack.c.h.b16 %v762
    %v1116 = vunpack.c.l.b16 %v763
    %v1117 = vunpack.c.h.b16 %v763
    %v1118 = vunpack.c.l.b16 %v764
    %v1119 = vunpack.c.h.b16 %v764
    %v1120 = vunpack.c.l.b16 %v765
    %v1121 = vunpack.c.h.b16 %v765
    %v1122 = vunpack.c.l.b16 %v766
    %v1123 = vunpack.c.h.b16 %v766
    %v1124 = vunpack.c.l.b16 %v767
    %v1125 = vunpack.c.h.b16 %v767
    %v1126 = vunpack.c.l.b16 %v768
    %v1127 = vunpack.c.h.b16 %v768
    %v1128 = vunpack.c.l.b16 %v769
    %v1129 = vunpack.c.h.b16 %v769
    %v1130 = vunpack.c.l.b16 %v770
    %v1131 = vunpack.c.h.b16 %v770
    %v1132 = vunpack.c.l.b16 %v771
    %v1133 = vunpack.c.h.b16 %v771
    %v1134 = vunpack.c.l.b16 %v772
    %v1135 = vunpack.c.h.b16 %v772
    %v1136 = vunpack.c.l.b16 %v773
    %v1137 = vunpack.c.h.b16 %v773
    %v1138 = vunpack.c.l.b16 %v774
    %v1139 = vunpack.c.h.b16 %v774
    %v1140 = vunpack.c.l.b16 %v775
    %v1141 = vunpack.c.h.b16 %v775
    %v1142 = vunpack.c.l.b16 %v776
    %v1143 = vunpack.c.h.b16 %v776
    %v1144 = vunpack.c.l.b16 %v777
    %v1145 = vunpack.c.h.b16 %v777
    %v1146 = vunpack.c.l.b16 %v778
    %v1147 = vunpack.c.h.b16 %v778
    %v1148 = vunpack.c.l.b16 %v779
    %v1149 = vunpack.c.h.b16 %v779
    %v1150 = vunpack.c.l.b16 %v780
    %v1151 = vunpack.c.h.b16 %v780
    %v1152 = vunpack.c.l.b16 %v781
    %v1153 = vunpack.c.h.b16 %v781
    %v1154 = vunpack.c.l.b16 %v782
    %v1155 = vunpack.c.h.b16 %v782
    %v1156 = vunpack.c.l.b16 %v783
    %v1157 = vunpack.c.h.b16 %v783
    %v1158 = vunpack.c.l.b16 %v784
    %v1159 = vunpack.c.h.b16 %v784
    %v1160 = vunpack.c.l.b16 %v785
    %v1161 = vunpack.c.h.b16 %v785
    %v1162 = vunpack.c.l.b16 %v786
    %v1163 = vunpack.c.h.b16 %v786
    %v1164 = vunpack.c.l.b16 %v787
    %v1165 = vunpack.c.h.b16 %v787
    %v1166 = vunpack.c.l.b16 %v788
    %v1167 = vunpack.c.h.b16 %v788
    %v1168 = vunpack.c.l.b16 %v789
    %v1169 = vunpack.c.h.b16 %v789
    %v1170 = vunpack.c.l.b16 %v790
    %v1171 = vunpack.c.h.b16 %v790
    %v1172 = vunpack.c.l.b16 %v791
    %v1173 = vunpack.c.h.b16 %v791
    %v1174 = vunpack.c.l.b16 %v792
    %v1175 = vunpack.c.h.b16 %v792
    %v1176 = vunpack.c.l.b16 %v793
    %v1177 = vunpack.c.h.b16 %v793
    %v1178 = vunpack.c.l.b16 %v794
    %v1179 = vunpack.c.h.b16 %v794
    %v1180 = vunpack.c.l.b16 %v795
    %v1181 = vunpack.c.h.b16 %v795
    %v1182 = vunpack.c.l.b16 %v796
    %v1183 = vunpack.c.h.b16 %v796
    %v1184 = vunpack.c.l.b16 %v797
    %v1185 = vunpack.c.h.b16 %v797
    %v1186 = vunpack.c.l.b16 %v798
    %v1187 = vunpack.c.h.b16 %v798
    %v1188 = vunpack.c.l.b16 %v799
    %v1189 = vunpack.c.h.b16 %v799
    %v1190 = vunpack.c.l.b16 %v800
    %v1191 = vunpack.c.h.b16 %v800
    %v1192 = vunpack.c.l.b16 %v801
    %v1193 = vunpack.c.h.b16 %v801
    %v1194 = vunpack.c.l.b16 %v802
    %v1195 = vunpack.c.h.b16 %v802
    %v1196 = vunpack.c.l.b16 %v803
    %v1197 = vunpack.c.h.b16 %v803
    %v1198 = vpack.c.b16 %v946, %v942
    %v1199 = vpack.c.b16 %v947, %v943
    %v1200 = vpack.c.b16 %v948, %v944
    %v1201 = vpack.c.b16 %v949, %v945
    %v1202 = vpack.c.b16 %v954, %v950
    %v1203 = vpack.c.b16 %v955, %v951
    %v1204 = vpack.c.b16 %v956, %v952
    %v1205 = vpack.c.b16 %v957, %v953
    %v1206 = vpack.c.b16 %v962, %v958
    %v1207 = vpack.c.b16 %v963, %v959
    %v1208 = vpack.c.b16 %v964, %v960
    %v1209 = vpack.c.b16 %v965, %v961
    %v1210 = vpack.c.b16 %v970, %v966
    %v1211 = vpack.c.b16 %v971, %v967
    %v1212 = vpack.c.b16 %v972, %v968
    %v1213 = vpack.c.b16 %v973, %v969
    %v1214 = vpack.c.b16 %v978, %v974
    %v1215 = vpack.c.b16 %v979, %v975
    %v1216 = vpack.c.b16 %v980, %v976
    %v1217 = vpack.c.b16 %v981, %v977
    %v1218 = vpack.c.b16 %v986, %v982
    %v1219 = vpack.c.b16 %v987, %v983
    %v1220 = vpack.c.b16 %v988, %v984
    %v1221 = vpack.c.b16 %v989, %v985
    %v1222 = vpack.c.b16 %v994, %v990
    %v1223 = vpack.c.b16 %v995, %v991
    %v1224 = vpack.c.b16 %v996, %v992
    %v1225 = vpack.c.b16 %v997, %v993
    %v1226 = vpack.c.b16 %v1002, %v998
    %v1227 = vpack.c.b16 %v1003, %v999
    %v1228 = vpack.c.b16 %v1004, %v1000
    %v1229 = vpack.c.b16 %v1005, %v1001
    %v1230 = vpack.c.b16 %v1010, %v1006
    %v1231 = vpack.c.b16 %v1011, %v1007
    %v1232 = vpack.c.b16 %v1012, %v1008
    %v1233 = vpack.c.b16 %v1013, %v1009
    %v1234 = vpack.c.b16 %v1018, %v1014
    %v1235 = vpack.c.b16 %v1019, %v1015
    %v1236 = vpack.c.b16 %v1020, %v1016
    %v1237 = vpack.c.b16 %v1021, %v1017
    %v1238 = vpack.c.b16 %v1026, %v1022
    %v1239 = vpack.c.b16 %v1027, %v1023
    %v1240 = vpack.c.b16 %v1028, %v1024
    %v1241 = vpack.c.b16 %v1029, %v1025
    %v1242 = vpack.c.b16 %v1034, %v1030
    %v1243 = vpack.c.b16 %v1035, %v1031
    %v1244 = vpack.c.b16 %v1036, %v1032
    %v1245 = vpack.c.b16 %v1037, %v1033
    %v1246 = vpack.c.b16 %v1042, %v1038
    %v1247 = vpack.c.b16 %v1043, %v1039
    %v1248 = vpack.c.b16 %v1044, %v1040
    %v1249 = vpack.c.b16 %v1045, %v1041
    %v1250 = vpack.c.b16 %v1050, %v1046
    %v1251 = vpack.c.b16 %v1051, %v1047
    %v1252 = vpack.c.b16 %v1052, %v1048
    %v1253 = vpack.c.b16 %v1053, %v1049
    %v1254 = vpack.c.b16 %v1058, %v1054
    %v1255 = vpack.c.b16 %v1059, %v1055
    %v1256 = vpack.c.b16 %v1060, %v1056
    %v1257 = vpack.c.b16 %v1061, %v1057
    %v1258 = vpack.c.b16 %v1066, %v1062
    %v1259 = vpack.c.b16 %v1067, %v1063
    %v1260 = vpack.c.b16 %v1068, %v1064
    %v1261 = vpack.c.b16 %v1069, %v1065
    %v1262 = vpack.c.b16 %v1074, %v1070
    %v1263 = vpack.c.b16 %v1075, %v1071
    %v1264 = vpack.c.b16 %v1076, %v1072
    %v1265 = vpack.c.b16 %v1077, %v1073
    %v1266 = vpack.c.b16 %v1082, %v1078
    %v1267 = vpack.c.b16 %v1083, %v1079
    %v1268 = vpack.c.b16 %v1084, %v1080
    %v1269 = vpack.c.b16 %v1085, %v1081
    %v1270 = vpack.c.b16 %v1090, %v1086
    %v1271 = vpack.c.b16 %v1091, %v1087
    %v1272 = vpack.c.b16 %v1092, %v1088
    %v1273 = vpack.c.b16 %v1093, %v1089
    %v1274 = vpack.c.b16 %v1098, %v1094
    %v1275 = vpack.c.b16 %v1099, %v1095
    %v1276 = vpack.c.b16 %v1100, %v1096
    %v1277 = vpack.c.b16 %v1101, %v1097
    %v1278 = vpack.c.b16 %v1106, %v1102
    %v1279 = vpack.c.b16 %v1107, %v1103
    %v1280 = vpack.c.b16 %v1108, %v1104
    %v1281 = vpack.c.b16 %v1109, %v1105
    %v1282 = vpack.c.b16 %v1114, %v1110
    %v1283 = vpack.c.b16 %v1115, %v1111
    %v1284 = vpack.c.b16 %v1116, %v1112
    %v1285 = vpack.c.b16 %v1117, %v1113
    %v1286 = vpack.c.b16 %v1122, %v1118
    %v1287 = vpack.c.b16 %v1123, %v1119
    %v1288 = vpack.c.b16 %v1124, %v1120
    %v1289 = vpack.c.b16 %v1125, %v1121
    %v1290 = vpack.c.b16 %v1130, %v1126
    %v1291 = vpack.c.b16 %v1131, %v1127
    %v1292 = vpack.c.b16 %v1132, %v1128
    %v1293 = vpack.c.b16 %v1133, %v1129
    %v1294 = vpack.c.b16 %v1138, %v1134
    %v1295 = vpack.c.b16 %v1139, %v1135
    %v1296 = vpack.c.b16 %v1140, %v1136
    %v1297 = vpack.c.b16 %v1141, %v1137
    %v1298 = vpack.c.b16 %v1146, %v1142
    %v1299 = vpack.c.b16 %v1147, %v1143
    %v1300 = vpack.c.b16 %v1148, %v1144
    %v1301 = vpack.c.b16 %v1149, %v1145
    %v1302 = vpack.c.b16 %v1154, %v1150
    %v1303 = vpack.c.b16 %v1155, %v1151
    %v1304 = vpack.c.b16 %v1156, %v1152
    %v1305 = vpack.c.b16 %v1157, %v1153
    %v1306 = vpack.c.b16 %v1162, %v1158
    %v1307 = vpack.c.b16 %v1163, %v1159
    %v1308 = vpack.c.b16 %v1164, %v1160
    %v1309 = vpack.c.b16 %v1165, %v1161
    %v1310 = vpack.c.b16 %v1170, %v1166
    %v1311 = vpack.c.b16 %v1171, %v1167
    %v1312 = vpack.c.b16 %v1172, %v1168
    %v1313 = vpack.c.b16 %v1173, %v1169
    %v1314 = vpack.c.b16 %v1178, %v1174
    %v1315 = vpack.c.b16 %v1179, %v1175
    %v1316 = vpack.c.b16 %v1180, %v1176
    %v1317 = vpack.c.b16 %v1181, %v1177
    %v1318 = vpack.c.b16 %v1186, %v1182
    %v1319 = vpack.c.b16 %v1187, %v1183
    %v1320 = vpack.c.b16 %v1188, %v1184
    %v1321 = vpack.c.b16 %v1189, %v1185
    %v1322 = vpack.c.b16 %v1194, %v1190
    %v1323 = vpack.c.b16 %v1195, %v1191
    %v1324 = vpack.c.b16 %v1196, %v1192
    %v1325 = vpack.c.b16 %v1197, %v1193
    %1454 = vmatpush.bf16.msra.mxu0 %v1226
    %1455 = vmatpush.bf16.msra.mxu0 %v1222
    %1456 = vmatpush.bf16.msra.mxu0 %v1218
    %1457 = vmatpush.bf16.msra.mxu0 %v1214
    %1458 = vmatpush.bf16.msra.mxu0 %v1210
    %1459 = vmatpush.bf16.msra.mxu0 %v1206
    %1460 = vmatpush.bf16.msra.mxu0 %v1202
    %1461 = vmatpush.bf16.msra.mxu0 %v1198
    %1462 = vmatmul.bf16.gmra.mxu0 %v672
    %v1463 = vpop.f32.mrf.mxu0
    %v1464 = vadd.f32 %v806, %v1463
    %v1465 = vpop.f32.mrf.mxu0
    %1466 = vdwg.mxu0
    %1467 = vmatpush.bf16.msra.mxu0 %v1258
    %1468 = vmatpush.bf16.msra.mxu0 %v1254
    %1469 = vmatpush.bf16.msra.mxu0 %v1250
    %1470 = vmatpush.bf16.msra.mxu0 %v1246
    %1471 = vmatpush.bf16.msra.mxu0 %v1242
    %1472 = vmatpush.bf16.msra.mxu0 %v1238
    %1473 = vmatpush.bf16.msra.mxu0 %v1234
    %1474 = vmatpush.bf16.msra.mxu0 %v1230
    %1475 = vmatmul.bf16.gmra.mxu0 %v673
    %v1476 = vpop.f32.mrf.mxu0
    %v1477 = vadd.f32 %v1464, %v1476
    %v1478 = vpop.f32.mrf.mxu0
    %1479 = vdwg.mxu0
    %1480 = vmatpush.bf16.msra.mxu0 %v1290
    %1481 = vmatpush.bf16.msra.mxu0 %v1286
    %1482 = vmatpush.bf16.msra.mxu0 %v1282
    %1483 = vmatpush.bf16.msra.mxu0 %v1278
    %1484 = vmatpush.bf16.msra.mxu0 %v1274
    %1485 = vmatpush.bf16.msra.mxu0 %v1270
    %1486 = vmatpush.bf16.msra.mxu0 %v1266
    %1487 = vmatpush.bf16.msra.mxu0 %v1262
    %1488 = vmatmul.bf16.gmra.mxu0 %v674
    %v1489 = vpop.f32.mrf.mxu0
    %v1490 = vadd.f32 %v1477, %v1489
    %v1491 = vpop.f32.mrf.mxu0
    %1492 = vdwg.mxu0
    %1493 = vmatpush.bf16.msra.mxu0 %v1322
    %1494 = vmatpush.bf16.msra.mxu0 %v1318
    %1495 = vmatpush.bf16.msra.mxu0 %v1314
    %1496 = vmatpush.bf16.msra.mxu0 %v1310
    %1497 = vmatpush.bf16.msra.mxu0 %v1306
    %1498 = vmatpush.bf16.msra.mxu0 %v1302
    %1499 = vmatpush.bf16.msra.mxu0 %v1298
    %1500 = vmatpush.bf16.msra.mxu0 %v1294
    %1501 = vmatmul.bf16.gmra.mxu0 %v675
    %v1502 = vpop.f32.mrf.mxu0
    %v1503 = vadd.f32 %v1490, %v1502
    %v1504 = vpop.f32.mrf.mxu0
    %1505 = vdwg.mxu0
    %1506 = vmatpush.bf16.msra.mxu0 %v1227
    %1507 = vmatpush.bf16.msra.mxu0 %v1223
    %1508 = vmatpush.bf16.msra.mxu0 %v1219
    %1509 = vmatpush.bf16.msra.mxu0 %v1215
    %1510 = vmatpush.bf16.msra.mxu0 %v1211
    %1511 = vmatpush.bf16.msra.mxu0 %v1207
    %1512 = vmatpush.bf16.msra.mxu0 %v1203
    %1513 = vmatpush.bf16.msra.mxu0 %v1199
    %1514 = vmatmul.bf16.gmra.mxu0 %v672
    %v1515 = vpop.f32.mrf.mxu0
    %v1516 = vadd.f32 %v807, %v1515
    %v1517 = vpop.f32.mrf.mxu0
    %1518 = vdwg.mxu0
    %1519 = vmatpush.bf16.msra.mxu0 %v1259
    %1520 = vmatpush.bf16.msra.mxu0 %v1255
    %1521 = vmatpush.bf16.msra.mxu0 %v1251
    %1522 = vmatpush.bf16.msra.mxu0 %v1247
    %1523 = vmatpush.bf16.msra.mxu0 %v1243
    %1524 = vmatpush.bf16.msra.mxu0 %v1239
    %1525 = vmatpush.bf16.msra.mxu0 %v1235
    %1526 = vmatpush.bf16.msra.mxu0 %v1231
    %1527 = vmatmul.bf16.gmra.mxu0 %v673
    %v1528 = vpop.f32.mrf.mxu0
    %v1529 = vadd.f32 %v1516, %v1528
    %v1530 = vpop.f32.mrf.mxu0
    %1531 = vdwg.mxu0
    %1532 = vmatpush.bf16.msra.mxu0 %v1291
    %1533 = vmatpush.bf16.msra.mxu0 %v1287
    %1534 = vmatpush.bf16.msra.mxu0 %v1283
    %1535 = vmatpush.bf16.msra.mxu0 %v1279
    %1536 = vmatpush.bf16.msra.mxu0 %v1275
    %1537 = vmatpush.bf16.msra.mxu0 %v1271
    %1538 = vmatpush.bf16.msra.mxu0 %v1267
    %1539 = vmatpush.bf16.msra.mxu0 %v1263
    %1540 = vmatmul.bf16.gmra.mxu0 %v674
    %v1541 = vpop.f32.mrf.mxu0
    %v1542 = vadd.f32 %v1529, %v1541
    %v1543 = vpop.f32.mrf.mxu0
    %1544 = vdwg.mxu0
    %1545 = vmatpush.bf16.msra.mxu0 %v1323
    %1546 = vmatpush.bf16.msra.mxu0 %v1319
    %1547 = vmatpush.bf16.msra.mxu0 %v1315
    %1548 = vmatpush.bf16.msra.mxu0 %v1311
    %1549 = vmatpush.bf16.msra.mxu0 %v1307
    %1550 = vmatpush.bf16.msra.mxu0 %v1303
    %1551 = vmatpush.bf16.msra.mxu0 %v1299
    %1552 = vmatpush.bf16.msra.mxu0 %v1295
    %1553 = vmatmul.bf16.gmra.mxu0 %v675
    %v1554 = vpop.f32.mrf.mxu0
    %v1555 = vadd.f32 %v1542, %v1554
    %v1556 = vpop.f32.mrf.mxu0
    %1557 = vdwg.mxu0
    %1558 = vmatpush.bf16.msra.mxu0 %v1228
    %1559 = vmatpush.bf16.msra.mxu0 %v1224
    %1560 = vmatpush.bf16.msra.mxu0 %v1220
    %1561 = vmatpush.bf16.msra.mxu0 %v1216
    %1562 = vmatpush.bf16.msra.mxu0 %v1212
    %1563 = vmatpush.bf16.msra.mxu0 %v1208
    %1564 = vmatpush.bf16.msra.mxu0 %v1204
    %1565 = vmatpush.bf16.msra.mxu0 %v1200
    %1566 = vmatmul.bf16.gmra.mxu0 %v672
    %v1567 = vpop.f32.mrf.mxu0
    %v1568 = vadd.f32 %v808, %v1567
    %v1569 = vpop.f32.mrf.mxu0
    %1570 = vdwg.mxu0
    %1571 = vmatpush.bf16.msra.mxu0 %v1260
    %1572 = vmatpush.bf16.msra.mxu0 %v1256
    %1573 = vmatpush.bf16.msra.mxu0 %v1252
    %1574 = vmatpush.bf16.msra.mxu0 %v1248
    %1575 = vmatpush.bf16.msra.mxu0 %v1244
    %1576 = vmatpush.bf16.msra.mxu0 %v1240
    %1577 = vmatpush.bf16.msra.mxu0 %v1236
    %1578 = vmatpush.bf16.msra.mxu0 %v1232
    %1579 = vmatmul.bf16.gmra.mxu0 %v673
    %v1580 = vpop.f32.mrf.mxu0
    %v1581 = vadd.f32 %v1568, %v1580
    %v1582 = vpop.f32.mrf.mxu0
    %1583 = vdwg.mxu0
    %1584 = vmatpush.bf16.msra.mxu0 %v1292
    %1585 = vmatpush.bf16.msra.mxu0 %v1288
    %1586 = vmatpush.bf16.msra.mxu0 %v1284
    %1587 = vmatpush.bf16.msra.mxu0 %v1280
    %1588 = vmatpush.bf16.msra.mxu0 %v1276
    %1589 = vmatpush.bf16.msra.mxu0 %v1272
    %1590 = vmatpush.bf16.msra.mxu0 %v1268
    %1591 = vmatpush.bf16.msra.mxu0 %v1264
    %1592 = vmatmul.bf16.gmra.mxu0 %v674
    %v1593 = vpop.f32.mrf.mxu0
    %v1594 = vadd.f32 %v1581, %v1593
    %v1595 = vpop.f32.mrf.mxu0
    %1596 = vdwg.mxu0
    %1597 = vmatpush.bf16.msra.mxu0 %v1324
    %1598 = vmatpush.bf16.msra.mxu0 %v1320
    %1599 = vmatpush.bf16.msra.mxu0 %v1316
    %1600 = vmatpush.bf16.msra.mxu0 %v1312
    %1601 = vmatpush.bf16.msra.mxu0 %v1308
    %1602 = vmatpush.bf16.msra.mxu0 %v1304
    %1603 = vmatpush.bf16.msra.mxu0 %v1300
    %1604 = vmatpush.bf16.msra.mxu0 %v1296
    %1605 = vmatmul.bf16.gmra.mxu0 %v675
    %v1606 = vpop.f32.mrf.mxu0
    %v1607 = vadd.f32 %v1594, %v1606
    %v1608 = vpop.f32.mrf.mxu0
    %1609 = vdwg.mxu0
    %1610 = vmatpush.bf16.msra.mxu0 %v1229
    %1611 = vmatpush.bf16.msra.mxu0 %v1225
    %1612 = vmatpush.bf16.msra.mxu0 %v1221
    %1613 = vmatpush.bf16.msra.mxu0 %v1217
    %1614 = vmatpush.bf16.msra.mxu0 %v1213
    %1615 = vmatpush.bf16.msra.mxu0 %v1209
    %1616 = vmatpush.bf16.msra.mxu0 %v1205
    %1617 = vmatpush.bf16.msra.mxu0 %v1201
    %1618 = vmatmul.bf16.gmra.mxu0 %v672
    %v1619 = vpop.f32.mrf.mxu0
    %v1620 = vadd.f32 %v809, %v1619
    %v1621 = vpop.f32.mrf.mxu0
    %1622 = vdwg.mxu0
    %1623 = vmatpush.bf16.msra.mxu0 %v1261
    %1624 = vmatpush.bf16.msra.mxu0 %v1257
    %1625 = vmatpush.bf16.msra.mxu0 %v1253
    %1626 = vmatpush.bf16.msra.mxu0 %v1249
    %1627 = vmatpush.bf16.msra.mxu0 %v1245
    %1628 = vmatpush.bf16.msra.mxu0 %v1241
    %1629 = vmatpush.bf16.msra.mxu0 %v1237
    %1630 = vmatpush.bf16.msra.mxu0 %v1233
    %1631 = vmatmul.bf16.gmra.mxu0 %v673
    %v1632 = vpop.f32.mrf.mxu0
    %v1633 = vadd.f32 %v1620, %v1632
    %v1634 = vpop.f32.mrf.mxu0
    %1635 = vdwg.mxu0
    %1636 = vmatpush.bf16.msra.mxu0 %v1293
    %1637 = vmatpush.bf16.msra.mxu0 %v1289
    %1638 = vmatpush.bf16.msra.mxu0 %v1285
    %1639 = vmatpush.bf16.msra.mxu0 %v1281
    %1640 = vmatpush.bf16.msra.mxu0 %v1277
    %1641 = vmatpush.bf16.msra.mxu0 %v1273
    %1642 = vmatpush.bf16.msra.mxu0 %v1269
    %1643 = vmatpush.bf16.msra.mxu0 %v1265
    %1644 = vmatmul.bf16.gmra.mxu0 %v674
    %v1645 = vpop.f32.mrf.mxu0
    %v1646 = vadd.f32 %v1633, %v1645
    %v1647 = vpop.f32.mrf.mxu0
    %1648 = vdwg.mxu0
    %1649 = vmatpush.bf16.msra.mxu0 %v1325
    %1650 = vmatpush.bf16.msra.mxu0 %v1321
    %1651 = vmatpush.bf16.msra.mxu0 %v1317
    %1652 = vmatpush.bf16.msra.mxu0 %v1313
    %1653 = vmatpush.bf16.msra.mxu0 %v1309
    %1654 = vmatpush.bf16.msra.mxu0 %v1305
    %1655 = vmatpush.bf16.msra.mxu0 %v1301
    %1656 = vmatpush.bf16.msra.mxu0 %v1297
    %1657 = vmatmul.bf16.gmra.mxu0 %v675
    %v1658 = vpop.f32.mrf.mxu0
    %v1659 = vadd.f32 %v1646, %v1658
    %v1660 = vpop.f32.mrf.mxu0
    %1661 = vdwg.mxu0
    %vm1662 = vcmp.gt.f32.partialorder %v1503, 0.0
    %vm1663 = vcmp.gt.f32.partialorder %v1555, 0.0
    %vm1664 = vcmp.gt.f32.partialorder %v1607, 0.0
    %vm1665 = vcmp.gt.f32.partialorder %v1659, 0.0
    %v1666 = vmul.f32 %v1503, 0.2
    %v1667 = vmul.f32 %v1555, 0.2
    %v1668 = vmul.f32 %v1607, 0.2
    %v1669 = vmul.f32 %v1659, 0.2
    %v1670 = vsel %vm1662, %v1503, %v1666
    %v1671 = vsel %vm1663, %v1555, %v1667
    %v1672 = vsel %vm1664, %v1607, %v1668
    %v1673 = vsel %vm1665, %v1659, %v1669
    %v1674 = vpack.c.bf16 %v1670, %v1670
    %v1675 = vpack.c.bf16 %v1671, %v1671
    %v1676 = vpack.c.bf16 %v1672, %v1672
    %v1677 = vpack.c.bf16 %v1673, %v1673
    %v1678 = vld [vmem:[#allocation11] sm:$0xff]
    %v1679 = vld [vmem:[#allocation11 + $0x8] sm:$0xff]
    %v1680 = vld [vmem:[#allocation11 + $0x10] sm:$0xff]
    %v1681 = vld [vmem:[#allocation11 + $0x18] sm:$0xff]
    %v1682 = vld [vmem:[#allocation11 + $0x20] sm:$0xff]
    %v1683 = vld [vmem:[#allocation11 + $0x28] sm:$0xff]
    %v1684 = vld [vmem:[#allocation11 + $0x30] sm:$0xff]
    %v1685 = vld [vmem:[#allocation11 + $0x38] sm:$0xff]
    %v1686 = vld [vmem:[#allocation11 + $0x40] sm:$0xff]
    %v1687 = vld [vmem:[#allocation11 + $0x48] sm:$0xff]
    %v1688 = vld [vmem:[#allocation11 + $0x50] sm:$0xff]
    %v1689 = vld [vmem:[#allocation11 + $0x58] sm:$0xff]
    %v1690 = vld [vmem:[#allocation11 + $0x60] sm:$0xff]
    %v1691 = vld [vmem:[#allocation11 + $0x68] sm:$0xff]
    %v1692 = vld [vmem:[#allocation11 + $0x70] sm:$0xff]
    %v1693 = vld [vmem:[#allocation11 + $0x78] sm:$0xff]
    %v1694 = vld [vmem:[#allocation11 + $0x80] sm:$0xff]
    %v1695 = vld [vmem:[#allocation11 + $0x88] sm:$0xff]
    %v1696 = vld [vmem:[#allocation11 + $0x90] sm:$0xff]
    %v1697 = vld [vmem:[#allocation11 + $0x98] sm:$0xff]
    %v1698 = vld [vmem:[#allocation11 + $0xa0] sm:$0xff]
    %v1699 = vld [vmem:[#allocation11 + $0xa8] sm:$0xff]
    %v1700 = vld [vmem:[#allocation11 + $0xb0] sm:$0xff]
    %v1701 = vld [vmem:[#allocation11 + $0xb8] sm:$0xff]
    %v1702 = vld [vmem:[#allocation11 + $0xc0] sm:$0xff]
    %v1703 = vld [vmem:[#allocation11 + $0xc8] sm:$0xff]
    %v1704 = vld [vmem:[#allocation11 + $0xd0] sm:$0xff]
    %v1705 = vld [vmem:[#allocation11 + $0xd8] sm:$0xff]
    %v1706 = vld [vmem:[#allocation11 + $0xe0] sm:$0xff]
    %v1707 = vld [vmem:[#allocation11 + $0xe8] sm:$0xff]
    %v1708 = vld [vmem:[#allocation11 + $0xf0] sm:$0xff]
    %v1709 = vld [vmem:[#allocation11 + $0xf8] sm:$0xff]
    %v1710 = vld [vmem:[#allocation11 + $0x100] sm:$0xff]
    %v1711 = vld [vmem:[#allocation11 + $0x108] sm:$0xff]
    %v1712 = vld [vmem:[#allocation11 + $0x110] sm:$0xff]
    %v1713 = vld [vmem:[#allocation11 + $0x118] sm:$0xff]
    %v1714 = vld [vmem:[#allocation11 + $0x120] sm:$0xff]
    %v1715 = vld [vmem:[#allocation11 + $0x128] sm:$0xff]
    %v1716 = vld [vmem:[#allocation11 + $0x130] sm:$0xff]
    %v1717 = vld [vmem:[#allocation11 + $0x138] sm:$0xff]
    %v1718 = vld [vmem:[#allocation11 + $0x140] sm:$0xff]
    %v1719 = vld [vmem:[#allocation11 + $0x148] sm:$0xff]
    %v1720 = vld [vmem:[#allocation11 + $0x150] sm:$0xff]
    %v1721 = vld [vmem:[#allocation11 + $0x158] sm:$0xff]
    %v1722 = vld [vmem:[#allocation11 + $0x160] sm:$0xff]
    %v1723 = vld [vmem:[#allocation11 + $0x168] sm:$0xff]
    %v1724 = vld [vmem:[#allocation11 + $0x170] sm:$0xff]
    %v1725 = vld [vmem:[#allocation11 + $0x178] sm:$0xff]
    %v1726 = vld [vmem:[#allocation11 + $0x180] sm:$0xff]
    %v1727 = vld [vmem:[#allocation11 + $0x188] sm:$0xff]
    %v1728 = vld [vmem:[#allocation11 + $0x190] sm:$0xff]
    %v1729 = vld [vmem:[#allocation11 + $0x198] sm:$0xff]
    %v1730 = vld [vmem:[#allocation11 + $0x1a0] sm:$0xff]
    %v1731 = vld [vmem:[#allocation11 + $0x1a8] sm:$0xff]
    %v1732 = vld [vmem:[#allocation11 + $0x1b0] sm:$0xff]
    %v1733 = vld [vmem:[#allocation11 + $0x1b8] sm:$0xff]
    %v1734 = vld [vmem:[#allocation11 + $0x1c0] sm:$0xff]
    %v1735 = vld [vmem:[#allocation11 + $0x1c8] sm:$0xff]
    %v1736 = vld [vmem:[#allocation11 + $0x1d0] sm:$0xff]
    %v1737 = vld [vmem:[#allocation11 + $0x1d8] sm:$0xff]
    %v1738 = vld [vmem:[#allocation11 + $0x1e0] sm:$0xff]
    %v1739 = vld [vmem:[#allocation11 + $0x1e8] sm:$0xff]
    %v1740 = vld [vmem:[#allocation11 + $0x1f0] sm:$0xff]
    %v1741 = vld [vmem:[#allocation11 + $0x1f8] sm:$0xff]
    %v1742 = vld [vmem:[%s6] sm:$0x3]
    %v1744 = vperm.slane %v1742, 0
    %v1745 = vperm.slane %v1742, 1
    %v1812 = vunpack.c.l.b16 %v1678
    %v1813 = vunpack.c.h.b16 %v1678
    %v1814 = vunpack.c.l.b16 %v1679
    %v1815 = vunpack.c.h.b16 %v1679
    %v1816 = vunpack.c.l.b16 %v1680
    %v1817 = vunpack.c.h.b16 %v1680
    %v1818 = vunpack.c.l.b16 %v1681
    %v1819 = vunpack.c.h.b16 %v1681
    %v1820 = vunpack.c.l.b16 %v1682
    %v1821 = vunpack.c.h.b16 %v1682
    %v1822 = vunpack.c.l.b16 %v1683
    %v1823 = vunpack.c.h.b16 %v1683
    %v1824 = vunpack.c.l.b16 %v1684
    %v1825 = vunpack.c.h.b16 %v1684
    %v1826 = vunpack.c.l.b16 %v1685
    %v1827 = vunpack.c.h.b16 %v1685
    %v1828 = vunpack.c.l.b16 %v1686
    %v1829 = vunpack.c.h.b16 %v1686
    %v1830 = vunpack.c.l.b16 %v1687
    %v1831 = vunpack.c.h.b16 %v1687
    %v1832 = vunpack.c.l.b16 %v1688
    %v1833 = vunpack.c.h.b16 %v1688
    %v1834 = vunpack.c.l.b16 %v1689
    %v1835 = vunpack.c.h.b16 %v1689
    %v1836 = vunpack.c.l.b16 %v1690
    %v1837 = vunpack.c.h.b16 %v1690
    %v1838 = vunpack.c.l.b16 %v1691
    %v1839 = vunpack.c.h.b16 %v1691
    %v1840 = vunpack.c.l.b16 %v1692
    %v1841 = vunpack.c.h.b16 %v1692
    %v1842 = vunpack.c.l.b16 %v1693
    %v1843 = vunpack.c.h.b16 %v1693
    %v1844 = vunpack.c.l.b16 %v1694
    %v1845 = vunpack.c.h.b16 %v1694
    %v1846 = vunpack.c.l.b16 %v1695
    %v1847 = vunpack.c.h.b16 %v1695
    %v1848 = vunpack.c.l.b16 %v1696
    %v1849 = vunpack.c.h.b16 %v1696
    %v1850 = vunpack.c.l.b16 %v1697
    %v1851 = vunpack.c.h.b16 %v1697
    %v1852 = vunpack.c.l.b16 %v1698
    %v1853 = vunpack.c.h.b16 %v1698
    %v1854 = vunpack.c.l.b16 %v1699
    %v1855 = vunpack.c.h.b16 %v1699
    %v1856 = vunpack.c.l.b16 %v1700
    %v1857 = vunpack.c.h.b16 %v1700
    %v1858 = vunpack.c.l.b16 %v1701
    %v1859 = vunpack.c.h.b16 %v1701
    %v1860 = vunpack.c.l.b16 %v1702
    %v1861 = vunpack.c.h.b16 %v1702
    %v1862 = vunpack.c.l.b16 %v1703
    %v1863 = vunpack.c.h.b16 %v1703
    %v1864 = vunpack.c.l.b16 %v1704
    %v1865 = vunpack.c.h.b16 %v1704
    %v1866 = vunpack.c.l.b16 %v1705
    %v1867 = vunpack.c.h.b16 %v1705
    %v1868 = vunpack.c.l.b16 %v1706
    %v1869 = vunpack.c.h.b16 %v1706
    %v1870 = vunpack.c.l.b16 %v1707
    %v1871 = vunpack.c.h.b16 %v1707
    %v1872 = vunpack.c.l.b16 %v1708
    %v1873 = vunpack.c.h.b16 %v1708
    %v1874 = vunpack.c.l.b16 %v1709
    %v1875 = vunpack.c.h.b16 %v1709
    %v1876 = vunpack.c.l.b16 %v1710
    %v1877 = vunpack.c.h.b16 %v1710
    %v1878 = vunpack.c.l.b16 %v1711
    %v1879 = vunpack.c.h.b16 %v1711
    %v1880 = vunpack.c.l.b16 %v1712
    %v1881 = vunpack.c.h.b16 %v1712
    %v1882 = vunpack.c.l.b16 %v1713
    %v1883 = vunpack.c.h.b16 %v1713
    %v1884 = vunpack.c.l.b16 %v1714
    %v1885 = vunpack.c.h.b16 %v1714
    %v1886 = vunpack.c.l.b16 %v1715
    %v1887 = vunpack.c.h.b16 %v1715
    %v1888 = vunpack.c.l.b16 %v1716
    %v1889 = vunpack.c.h.b16 %v1716
    %v1890 = vunpack.c.l.b16 %v1717
    %v1891 = vunpack.c.h.b16 %v1717
    %v1892 = vunpack.c.l.b16 %v1718
    %v1893 = vunpack.c.h.b16 %v1718
    %v1894 = vunpack.c.l.b16 %v1719
    %v1895 = vunpack.c.h.b16 %v1719
    %v1896 = vunpack.c.l.b16 %v1720
    %v1897 = vunpack.c.h.b16 %v1720
    %v1898 = vunpack.c.l.b16 %v1721
    %v1899 = vunpack.c.h.b16 %v1721
    %v1900 = vunpack.c.l.b16 %v1722
    %v1901 = vunpack.c.h.b16 %v1722
    %v1902 = vunpack.c.l.b16 %v1723
    %v1903 = vunpack.c.h.b16 %v1723
    %v1904 = vunpack.c.l.b16 %v1724
    %v1905 = vunpack.c.h.b16 %v1724
    %v1906 = vunpack.c.l.b16 %v1725
    %v1907 = vunpack.c.h.b16 %v1725
    %v1908 = vunpack.c.l.b16 %v1726
    %v1909 = vunpack.c.h.b16 %v1726
    %v1910 = vunpack.c.l.b16 %v1727
    %v1911 = vunpack.c.h.b16 %v1727
    %v1912 = vunpack.c.l.b16 %v1728
    %v1913 = vunpack.c.h.b16 %v1728
    %v1914 = vunpack.c.l.b16 %v1729
    %v1915 = vunpack.c.h.b16 %v1729
    %v1916 = vunpack.c.l.b16 %v1730
    %v1917 = vunpack.c.h.b16 %v1730
    %v1918 = vunpack.c.l.b16 %v1731
    %v1919 = vunpack.c.h.b16 %v1731
    %v1920 = vunpack.c.l.b16 %v1732
    %v1921 = vunpack.c.h.b16 %v1732
    %v1922 = vunpack.c.l.b16 %v1733
    %v1923 = vunpack.c.h.b16 %v1733
    %v1924 = vunpack.c.l.b16 %v1734
    %v1925 = vunpack.c.h.b16 %v1734
    %v1926 = vunpack.c.l.b16 %v1735
    %v1927 = vunpack.c.h.b16 %v1735
    %v1928 = vunpack.c.l.b16 %v1736
    %v1929 = vunpack.c.h.b16 %v1736
    %v1930 = vunpack.c.l.b16 %v1737
    %v1931 = vunpack.c.h.b16 %v1737
    %v1932 = vunpack.c.l.b16 %v1738
    %v1933 = vunpack.c.h.b16 %v1738
    %v1934 = vunpack.c.l.b16 %v1739
    %v1935 = vunpack.c.h.b16 %v1739
    %v1936 = vunpack.c.l.b16 %v1740
    %v1937 = vunpack.c.h.b16 %v1740
    %v1938 = vunpack.c.l.b16 %v1741
    %v1939 = vunpack.c.h.b16 %v1741
    %v1940 = vpack.c.b16 %v1814, %v1812
    %v1941 = vpack.c.b16 %v1815, %v1813
    %v1942 = vpack.c.b16 %v1818, %v1816
    %v1943 = vpack.c.b16 %v1819, %v1817
    %v1944 = vpack.c.b16 %v1822, %v1820
    %v1945 = vpack.c.b16 %v1823, %v1821
    %v1946 = vpack.c.b16 %v1826, %v1824
    %v1947 = vpack.c.b16 %v1827, %v1825
    %v1948 = vpack.c.b16 %v1830, %v1828
    %v1949 = vpack.c.b16 %v1831, %v1829
    %v1950 = vpack.c.b16 %v1834, %v1832
    %v1951 = vpack.c.b16 %v1835, %v1833
    %v1952 = vpack.c.b16 %v1838, %v1836
    %v1953 = vpack.c.b16 %v1839, %v1837
    %v1954 = vpack.c.b16 %v1842, %v1840
    %v1955 = vpack.c.b16 %v1843, %v1841
    %v1956 = vpack.c.b16 %v1846, %v1844
    %v1957 = vpack.c.b16 %v1847, %v1845
    %v1958 = vpack.c.b16 %v1850, %v1848
    %v1959 = vpack.c.b16 %v1851, %v1849
    %v1960 = vpack.c.b16 %v1854, %v1852
    %v1961 = vpack.c.b16 %v1855, %v1853
    %v1962 = vpack.c.b16 %v1858, %v1856
    %v1963 = vpack.c.b16 %v1859, %v1857
    %v1964 = vpack.c.b16 %v1862, %v1860
    %v1965 = vpack.c.b16 %v1863, %v1861
    %v1966 = vpack.c.b16 %v1866, %v1864
    %v1967 = vpack.c.b16 %v1867, %v1865
    %v1968 = vpack.c.b16 %v1870, %v1868
    %v1969 = vpack.c.b16 %v1871, %v1869
    %v1970 = vpack.c.b16 %v1874, %v1872
    %v1971 = vpack.c.b16 %v1875, %v1873
    %v1972 = vpack.c.b16 %v1878, %v1876
    %v1973 = vpack.c.b16 %v1879, %v1877
    %v1974 = vpack.c.b16 %v1882, %v1880
    %v1975 = vpack.c.b16 %v1883, %v1881
    %v1976 = vpack.c.b16 %v1886, %v1884
    %v1977 = vpack.c.b16 %v1887, %v1885
    %v1978 = vpack.c.b16 %v1890, %v1888
    %v1979 = vpack.c.b16 %v1891, %v1889
    %v1980 = vpack.c.b16 %v1894, %v1892
    %v1981 = vpack.c.b16 %v1895, %v1893
    %v1982 = vpack.c.b16 %v1898, %v1896
    %v1983 = vpack.c.b16 %v1899, %v1897
    %v1984 = vpack.c.b16 %v1902, %v1900
    %v1985 = vpack.c.b16 %v1903, %v1901
    %v1986 = vpack.c.b16 %v1906, %v1904
    %v1987 = vpack.c.b16 %v1907, %v1905
    %v1988 = vpack.c.b16 %v1910, %v1908
    %v1989 = vpack.c.b16 %v1911, %v1909
    %v1990 = vpack.c.b16 %v1914, %v1912
    %v1991 = vpack.c.b16 %v1915, %v1913
    %v1992 = vpack.c.b16 %v1918, %v1916
    %v1993 = vpack.c.b16 %v1919, %v1917
    %v1994 = vpack.c.b16 %v1922, %v1920
    %v1995 = vpack.c.b16 %v1923, %v1921
    %v1996 = vpack.c.b16 %v1926, %v1924
    %v1997 = vpack.c.b16 %v1927, %v1925
    %v1998 = vpack.c.b16 %v1930, %v1928
    %v1999 = vpack.c.b16 %v1931, %v1929
    %v2000 = vpack.c.b16 %v1934, %v1932
    %v2001 = vpack.c.b16 %v1935, %v1933
    %v2002 = vpack.c.b16 %v1938, %v1936
    %v2003 = vpack.c.b16 %v1939, %v1937
    %2068 = vmatpush.bf16.msra.mxu0 %v1954
    %2069 = vmatpush.bf16.msra.mxu0 %v1952
    %2070 = vmatpush.bf16.msra.mxu0 %v1950
    %2071 = vmatpush.bf16.msra.mxu0 %v1948
    %2072 = vmatpush.bf16.msra.mxu0 %v1946
    %2073 = vmatpush.bf16.msra.mxu0 %v1944
    %2074 = vmatpush.bf16.msra.mxu0 %v1942
    %2075 = vmatpush.bf16.msra.mxu0 %v1940
    %2076 = vmatmul.bf16.gmra.mxu0 %v1674
    %v2077 = vpop.f32.mrf.mxu0
    %v2078 = vadd.f32 %v1744, %v2077
    %v2079 = vpop.f32.mrf.mxu0
    %2080 = vdwg.mxu0
    %2081 = vmatpush.bf16.msra.mxu0 %v1970
    %2082 = vmatpush.bf16.msra.mxu0 %v1968
    %2083 = vmatpush.bf16.msra.mxu0 %v1966
    %2084 = vmatpush.bf16.msra.mxu0 %v1964
    %2085 = vmatpush.bf16.msra.mxu0 %v1962
    %2086 = vmatpush.bf16.msra.mxu0 %v1960
    %2087 = vmatpush.bf16.msra.mxu0 %v1958
    %2088 = vmatpush.bf16.msra.mxu0 %v1956
    %2089 = vmatmul.bf16.gmra.mxu0 %v1675
    %v2090 = vpop.f32.mrf.mxu0
    %v2091 = vadd.f32 %v2078, %v2090
    %v2092 = vpop.f32.mrf.mxu0
    %2093 = vdwg.mxu0
    %2094 = vmatpush.bf16.msra.mxu0 %v1986
    %2095 = vmatpush.bf16.msra.mxu0 %v1984
    %2096 = vmatpush.bf16.msra.mxu0 %v1982
    %2097 = vmatpush.bf16.msra.mxu0 %v1980
    %2098 = vmatpush.bf16.msra.mxu0 %v1978
    %2099 = vmatpush.bf16.msra.mxu0 %v1976
    %2100 = vmatpush.bf16.msra.mxu0 %v1974
    %2101 = vmatpush.bf16.msra.mxu0 %v1972
    %2102 = vmatmul.bf16.gmra.mxu0 %v1676
    %v2103 = vpop.f32.mrf.mxu0
    %v2104 = vadd.f32 %v2091, %v2103
    %v2105 = vpop.f32.mrf.mxu0
    %2106 = vdwg.mxu0
    %2107 = vmatpush.bf16.msra.mxu0 %v2002
    %2108 = vmatpush.bf16.msra.mxu0 %v2000
    %2109 = vmatpush.bf16.msra.mxu0 %v1998
    %2110 = vmatpush.bf16.msra.mxu0 %v1996
    %2111 = vmatpush.bf16.msra.mxu0 %v1994
    %2112 = vmatpush.bf16.msra.mxu0 %v1992
    %2113 = vmatpush.bf16.msra.mxu0 %v1990
    %2114 = vmatpush.bf16.msra.mxu0 %v1988
    %2115 = vmatmul.bf16.gmra.mxu0 %v1677
    %v2116 = vpop.f32.mrf.mxu0
    %v2117 = vadd.f32 %v2104, %v2116
    %v2118 = vpop.f32.mrf.mxu0
    %2119 = vdwg.mxu0
    %2120 = vmatpush.bf16.msra.mxu0 %v1955
    %2121 = vmatpush.bf16.msra.mxu0 %v1953
    %2122 = vmatpush.bf16.msra.mxu0 %v1951
    %2123 = vmatpush.bf16.msra.mxu0 %v1949
    %2124 = vmatpush.bf16.msra.mxu0 %v1947
    %2125 = vmatpush.bf16.msra.mxu0 %v1945
    %2126 = vmatpush.bf16.msra.mxu0 %v1943
    %2127 = vmatpush.bf16.msra.mxu0 %v1941
    %2128 = vmatmul.bf16.gmra.mxu0 %v1674
    %v2129 = vpop.f32.mrf.mxu0
    %v2130 = vadd.f32 %v1745, %v2129
    %v2131 = vpop.f32.mrf.mxu0
    %2132 = vdwg.mxu0
    %2133 = vmatpush.bf16.msra.mxu0 %v1971
    %2134 = vmatpush.bf16.msra.mxu0 %v1969
    %2135 = vmatpush.bf16.msra.mxu0 %v1967
    %2136 = vmatpush.bf16.msra.mxu0 %v1965
    %2137 = vmatpush.bf16.msra.mxu0 %v1963
    %2138 = vmatpush.bf16.msra.mxu0 %v1961
    %2139 = vmatpush.bf16.msra.mxu0 %v1959
    %2140 = vmatpush.bf16.msra.mxu0 %v1957
    %2141 = vmatmul.bf16.gmra.mxu0 %v1675
    %v2142 = vpop.f32.mrf.mxu0
    %v2143 = vadd.f32 %v2130, %v2142
    %v2144 = vpop.f32.mrf.mxu0
    %2145 = vdwg.mxu0
    %2146 = vmatpush.bf16.msra.mxu0 %v1987
    %2147 = vmatpush.bf16.msra.mxu0 %v1985
    %2148 = vmatpush.bf16.msra.mxu0 %v1983
    %2149 = vmatpush.bf16.msra.mxu0 %v1981
    %2150 = vmatpush.bf16.msra.mxu0 %v1979
    %2151 = vmatpush.bf16.msra.mxu0 %v1977
    %2152 = vmatpush.bf16.msra.mxu0 %v1975
    %2153 = vmatpush.bf16.msra.mxu0 %v1973
    %2154 = vmatmul.bf16.gmra.mxu0 %v1676
    %v2155 = vpop.f32.mrf.mxu0
    %v2156 = vadd.f32 %v2143, %v2155
    %v2157 = vpop.f32.mrf.mxu0
    %2158 = vdwg.mxu0
    %2159 = vmatpush.bf16.msra.mxu0 %v2003
    %2160 = vmatpush.bf16.msra.mxu0 %v2001
    %2161 = vmatpush.bf16.msra.mxu0 %v1999
    %2162 = vmatpush.bf16.msra.mxu0 %v1997
    %2163 = vmatpush.bf16.msra.mxu0 %v1995
    %2164 = vmatpush.bf16.msra.mxu0 %v1993
    %2165 = vmatpush.bf16.msra.mxu0 %v1991
    %2166 = vmatpush.bf16.msra.mxu0 %v1989
    %2167 = vmatmul.bf16.gmra.mxu0 %v1677
    %v2168 = vpop.f32.mrf.mxu0
    %v2169 = vadd.f32 %v2156, %v2168
    %v2170 = vpop.f32.mrf.mxu0
    %2171 = vdwg.mxu0
    %vm2172 = vcmp.gt.f32.partialorder %v2117, 0.0
    %vm2173 = vcmp.gt.f32.partialorder %v2169, 0.0
    %v2174 = vmul.f32 %v2117, 0.2
    %v2175 = vmul.f32 %v2169, 0.2
    %v2176 = vsel %vm2172, %v2117, %v2174
    %v2177 = vsel %vm2173, %v2169, %v2175
    %v2178 = vpack.c.bf16 %v2176, %v2176
    %v2179 = vpack.c.bf16 %v2177, %v2177
    %v2180 = vld [vmem:[#allocation13] sm:$0xf]
    %v2181 = vld [vmem:[#allocation13 + $0x4] sm:$0xf]
    %v2182 = vld [vmem:[#allocation13 + $0x8] sm:$0xf]
    %v2183 = vld [vmem:[#allocation13 + $0xc] sm:$0xf]
    %v2184 = vld [vmem:[#allocation13 + $0x10] sm:$0xf]
    %v2185 = vld [vmem:[#allocation13 + $0x14] sm:$0xf]
    %v2186 = vld [vmem:[#allocation13 + $0x18] sm:$0xf]
    %v2187 = vld [vmem:[#allocation13 + $0x1c] sm:$0xf]
    %v2188 = vld [vmem:[#allocation13 + $0x20] sm:$0xf]
    %v2189 = vld [vmem:[#allocation13 + $0x24] sm:$0xf]
    %v2190 = vld [vmem:[#allocation13 + $0x28] sm:$0xf]
    %v2191 = vld [vmem:[#allocation13 + $0x2c] sm:$0xf]
    %v2192 = vld [vmem:[#allocation13 + $0x30] sm:$0xf]
    %v2193 = vld [vmem:[#allocation13 + $0x34] sm:$0xf]
    %v2194 = vld [vmem:[#allocation13 + $0x38] sm:$0xf]
    %v2195 = vld [vmem:[#allocation13 + $0x3c] sm:$0xf]
    %v2196 = vld [vmem:[#allocation13 + $0x40] sm:$0xf]
    %v2197 = vld [vmem:[#allocation13 + $0x44] sm:$0xf]
    %v2198 = vld [vmem:[#allocation13 + $0x48] sm:$0xf]
    %v2199 = vld [vmem:[#allocation13 + $0x4c] sm:$0xf]
    %v2200 = vld [vmem:[#allocation13 + $0x50] sm:$0xf]
    %v2201 = vld [vmem:[#allocation13 + $0x54] sm:$0xf]
    %v2202 = vld [vmem:[#allocation13 + $0x58] sm:$0xf]
    %v2203 = vld [vmem:[#allocation13 + $0x5c] sm:$0xf]
    %v2204 = vld [vmem:[#allocation13 + $0x60] sm:$0xf]
    %v2205 = vld [vmem:[#allocation13 + $0x64] sm:$0xf]
    %v2206 = vld [vmem:[#allocation13 + $0x68] sm:$0xf]
    %v2207 = vld [vmem:[#allocation13 + $0x6c] sm:$0xf]
    %v2208 = vld [vmem:[#allocation13 + $0x70] sm:$0xf]
    %v2209 = vld [vmem:[#allocation13 + $0x74] sm:$0xf]
    %v2210 = vld [vmem:[#allocation13 + $0x78] sm:$0xf]
    %v2211 = vld [vmem:[#allocation13 + $0x7c] sm:$0xf]
    %v2212 = vld [vmem:[%s8] sm:$0x1]
    %v2214 = vperm.slane %v2212, 0
    %v2248 = vunpack.c.l.b16 %v2180
    %v2249 = vunpack.c.l.b16 %v2181
    %v2250 = vunpack.c.l.b16 %v2182
    %v2251 = vunpack.c.l.b16 %v2183
    %v2252 = vunpack.c.l.b16 %v2184
    %v2253 = vunpack.c.l.b16 %v2185
    %v2254 = vunpack.c.l.b16 %v2186
    %v2255 = vunpack.c.l.b16 %v2187
    %v2256 = vunpack.c.l.b16 %v2188
    %v2257 = vunpack.c.l.b16 %v2189
    %v2258 = vunpack.c.l.b16 %v2190
    %v2259 = vunpack.c.l.b16 %v2191
    %v2260 = vunpack.c.l.b16 %v2192
    %v2261 = vunpack.c.l.b16 %v2193
    %v2262 = vunpack.c.l.b16 %v2194
    %v2263 = vunpack.c.l.b16 %v2195
    %v2264 = vunpack.c.l.b16 %v2196
    %v2265 = vunpack.c.l.b16 %v2197
    %v2266 = vunpack.c.l.b16 %v2198
    %v2267 = vunpack.c.l.b16 %v2199
    %v2268 = vunpack.c.l.b16 %v2200
    %v2269 = vunpack.c.l.b16 %v2201
    %v2270 = vunpack.c.l.b16 %v2202
    %v2271 = vunpack.c.l.b16 %v2203
    %v2272 = vunpack.c.l.b16 %v2204
    %v2273 = vunpack.c.l.b16 %v2205
    %v2274 = vunpack.c.l.b16 %v2206
    %v2275 = vunpack.c.l.b16 %v2207
    %v2276 = vunpack.c.l.b16 %v2208
    %v2277 = vunpack.c.l.b16 %v2209
    %v2278 = vunpack.c.l.b16 %v2210
    %v2279 = vunpack.c.l.b16 %v2211
    %v2280 = vpack.c.b16 %v2249, %v2248
    %v2281 = vpack.c.b16 %v2251, %v2250
    %v2282 = vpack.c.b16 %v2253, %v2252
    %v2283 = vpack.c.b16 %v2255, %v2254
    %v2284 = vpack.c.b16 %v2257, %v2256
    %v2285 = vpack.c.b16 %v2259, %v2258
    %v2286 = vpack.c.b16 %v2261, %v2260
    %v2287 = vpack.c.b16 %v2263, %v2262
    %v2288 = vpack.c.b16 %v2265, %v2264
    %v2289 = vpack.c.b16 %v2267, %v2266
    %v2290 = vpack.c.b16 %v2269, %v2268
    %v2291 = vpack.c.b16 %v2271, %v2270
    %v2292 = vpack.c.b16 %v2273, %v2272
    %v2293 = vpack.c.b16 %v2275, %v2274
    %v2294 = vpack.c.b16 %v2277, %v2276
    %v2295 = vpack.c.b16 %v2279, %v2278
    %2312 = vmatpush.bf16.msra.mxu0 %v2287
    %2313 = vmatpush.bf16.msra.mxu0 %v2286
    %2314 = vmatpush.bf16.msra.mxu0 %v2285
    %2315 = vmatpush.bf16.msra.mxu0 %v2284
    %2316 = vmatpush.bf16.msra.mxu0 %v2283
    %2317 = vmatpush.bf16.msra.mxu0 %v2282
    %2318 = vmatpush.bf16.msra.mxu0 %v2281
    %2319 = vmatpush.bf16.msra.mxu0 %v2280
    %2320 = vmatmul.bf16.gmra.mxu0 %v2178
    %v2321 = vpop.f32.mrf.mxu0
    %v2322 = vadd.f32 %v2214, %v2321
    %v2323 = vpop.f32.mrf.mxu0
    %2324 = vdwg.mxu0
    %2325 = vmatpush.bf16.msra.mxu0 %v2295
    %2326 = vmatpush.bf16.msra.mxu0 %v2294
    %2327 = vmatpush.bf16.msra.mxu0 %v2293
    %2328 = vmatpush.bf16.msra.mxu0 %v2292
    %2329 = vmatpush.bf16.msra.mxu0 %v2291
    %2330 = vmatpush.bf16.msra.mxu0 %v2290
    %2331 = vmatpush.bf16.msra.mxu0 %v2289
    %2332 = vmatpush.bf16.msra.mxu0 %v2288
    %2333 = vmatmul.bf16.gmra.mxu0 %v2179
    %v2334 = vpop.f32.mrf.mxu0
    %v2335 = vadd.f32 %v2322, %v2334
    %v2336 = vpop.f32.mrf.mxu0
    %2337 = vdwg.mxu0
    %vm2338 = vcmp.gt.f32.partialorder %v2335, 0.0
    %v2339 = vmul.f32 %v2335, 0.2
    %v2340 = vsel %vm2338, %v2335, %v2339
    %v2341 = vpack.c.bf16 %v2340, %v2340
    %v2342 = vld [vmem:[#allocation14] sm:$0xf]
    %v2343 = vld [vmem:[#allocation14 + $0x4] sm:$0xf]
    %v2344 = vld [vmem:[#allocation14 + $0x8] sm:$0xf]
    %v2345 = vld [vmem:[#allocation14 + $0xc] sm:$0xf]
    %v2346 = vld [vmem:[#allocation14 + $0x10] sm:$0xf]
    %v2347 = vld [vmem:[#allocation14 + $0x14] sm:$0xf]
    %v2348 = vld [vmem:[#allocation14 + $0x18] sm:$0xf]
    %v2349 = vld [vmem:[#allocation14 + $0x1c] sm:$0xf]
    %v2350 = vld [vmem:[#allocation14 + $0x20] sm:$0xf]
    %v2351 = vld [vmem:[#allocation14 + $0x24] sm:$0xf]
    %v2352 = vld [vmem:[#allocation14 + $0x28] sm:$0xf]
    %v2353 = vld [vmem:[#allocation14 + $0x2c] sm:$0xf]
    %v2354 = vld [vmem:[#allocation14 + $0x30] sm:$0xf]
    %v2355 = vld [vmem:[#allocation14 + $0x34] sm:$0xf]
    %v2356 = vld [vmem:[#allocation14 + $0x38] sm:$0xf]
    %v2357 = vld [vmem:[#allocation14 + $0x3c] sm:$0xf]
    %v2358 = vld [vmem:[%s10] sm:$0x1]
    %v2360 = vperm.slane %v2358, 0
    %v2378 = vunpack.c.l.b16 %v2342
    %v2379 = vunpack.c.l.b16 %v2343
    %v2380 = vunpack.c.l.b16 %v2344
    %v2381 = vunpack.c.l.b16 %v2345
    %v2382 = vunpack.c.l.b16 %v2346
    %v2383 = vunpack.c.l.b16 %v2347
    %v2384 = vunpack.c.l.b16 %v2348
    %v2385 = vunpack.c.l.b16 %v2349
    %v2386 = vunpack.c.l.b16 %v2350
    %v2387 = vunpack.c.l.b16 %v2351
    %v2388 = vunpack.c.l.b16 %v2352
    %v2389 = vunpack.c.l.b16 %v2353
    %v2390 = vunpack.c.l.b16 %v2354
    %v2391 = vunpack.c.l.b16 %v2355
    %v2392 = vunpack.c.l.b16 %v2356
    %v2393 = vunpack.c.l.b16 %v2357
    %v2394 = vpack.c.b16 %v2379, %v2378
    %v2395 = vpack.c.b16 %v2381, %v2380
    %v2396 = vpack.c.b16 %v2383, %v2382
    %v2397 = vpack.c.b16 %v2385, %v2384
    %v2398 = vpack.c.b16 %v2387, %v2386
    %v2399 = vpack.c.b16 %v2389, %v2388
    %v2400 = vpack.c.b16 %v2391, %v2390
    %v2401 = vpack.c.b16 %v2393, %v2392
    %2410 = vmatpush.bf16.msra.mxu0 %v2401
    %2411 = vmatpush.bf16.msra.mxu0 %v2400
    %2412 = vmatpush.bf16.msra.mxu0 %v2399
    %2413 = vmatpush.bf16.msra.mxu0 %v2398
    %2414 = vmatpush.bf16.msra.mxu0 %v2397
    %2415 = vmatpush.bf16.msra.mxu0 %v2396
    %2416 = vmatpush.bf16.msra.mxu0 %v2395
    %2417 = vmatpush.bf16.msra.mxu0 %v2394
    %2418 = vmatmul.bf16.gmra.mxu0 %v2341
    %v2419 = vpop.f32.mrf.mxu0
    %v2420 = vadd.f32 %v2360, %v2419
    %v2421 = vpop.f32.mrf.mxu0
    %2422 = vdwg.mxu0
    %2423 = vst [vmem:[#allocation16] sm:$0xff] %v2420
    // Predicated region
    $region78: #{tpu_custom_call.1} parent=1 // pred_check
      _
    $region79: #{tpu_custom_call.1} parent=1 // pred_check_branch
      %2425 = sbr.rel (0) target = $region81
    $region80: #{tpu_custom_call.1} parent=1 // pred_region
      %2427 = vsyncadd [#allocation4], 0
      %s2429 = sshll.u32 [#allocation16], 4
      %s2430 = int_to_ptr.vmem [resolvable:$true] %s2429
      %s2431 = sshll.u32 %s11, 4
      %s2432 = int_to_ptr.hbm [resolvable:$true] %s2431
      %2434 = dma.vmem_to_hbm [thread:$0]  %s2430, 128, %s2432, [#allocation4]
    $region81: #{tpu_custom_call.1} parent=1 // pred_fallthru
      _
    // Predicated region
    $region82: #{tpu_custom_call.1} parent=1 // pred_check
      _
    $region83: #{tpu_custom_call.1} parent=1 // pred_check_branch
      %2436 = sbr.rel (0) target = $region85
    $region84: #{tpu_custom_call.1} parent=1 // pred_region
      %2438 = dma.done [#allocation4], 128
    $region85: #{tpu_custom_call.1} parent=1 // pred_fallthru
      _
    %2439 = vsyncpa [#allocation3], 1
    %2440 = vsyncpa [#allocation6], 1
    %2441 = vsyncpa [#allocation9], 1
    %2442 = vsyncpa [#allocation12], 1
    %2443 = vsyncpa [#allocation15], 1
    %2444 = vsyncpa [#allocation4], 1

</llo_original>
